<compile_context>
chip_gen: v7x
topology: tpu7x:2x2x1
jax: 0.10.0
libtpu: 0.0.40
codegen_flags: <defaults>
</compile_context>

<pallas_src>
import jax
import jax.numpy as jnp
import numpy as np
from jax.experimental import pallas as pl
from jax.experimental.pallas import tpu as pltpu

X_DIM, Y_DIM = 2, 1
H_DIM, R_DIM, Z_DIM = 32, 32, 32   # small stand-ins for the 400/128/128 defaults


# ----------------------------------------------------------------------------
# Pallas kernel: one grid step == one batch element, feature-major throughout
# (features on sublanes, points on lanes), fully fused encoder/latent/decoder.
# ----------------------------------------------------------------------------
def neural_process_kernel(
    cxy_ref,                      # (1, x+y+1, Nc)  rows: [x | y | 1]
    x_ref,                        # (1, x+1, Np)    rows: [x | 1], Np = Nc+Nt
    eps_ref,                      # (1, Z, 1)       rsample noise (f32)
    # packed weights, transposed for feature-major use; last column is the bias
    e_w1, e_w2, e_w3,             # encoder:  (H,x+y+1) (H,H+1) (R,H+1)
    l_w1, l_w2,                   # latent:   (H,R+1)   (2Z,H+1) = [mu;log_sig]
    d_w1x, d_wz, d_w2, d_w3,      # decoder:  (H,x+1) (H,Z) (H,H+1) (2Y,H+1)
    # outputs
    lat_ref,                      # (1, 2Z, 1): [mu ; sigma]
    pred_ref,                     # (1, 2Y, Np): [pred_mu ; pred_sigma]
):
    f32 = jnp.float32
    cdt = e_w1.dtype                       # matmul operand dtype (bf16 in prod)
    zdim = d_wz.shape[1]
    ydim = d_w3.shape[0] // 2

    def wb(ref):
        # split a packed (out, in+1) slab into weight (out, in) and bias (out, 1)
        k = ref.shape[1] - 1
        return ref[:, 0:k], ref[:, k:k + 1].astype(f32)

    # ---- Encoder: per-point MLP on [x; y; 1] columns, then mean over points --
    cxy = cxy_ref[0]                                                   # (x+y+1, Nc)
    h = jnp.dot(e_w1[...], cxy, preferred_element_type=f32)            # bias via ones row
    h = jnp.maximum(h, 0.0).astype(cdt)
    w, b = wb(e_w2)
    h = jnp.maximum(jnp.dot(w, h, preferred_element_type=f32) + b, 0.0).astype(cdt)
    w, b = wb(e_w3)
    r_i = jnp.dot(w, h, preferred_element_type=f32) + b                # (R, Nc) f32
    r = jnp.mean(r_i, axis=1, keepdims=True)                           # (R, 1)

    # ---- Latent encoder: r -> Normal(mu, sigma), fused [mu; log_sigma] head --
    w, b = wb(l_w1)
    hl = jnp.maximum(jnp.dot(w, r.astype(cdt), preferred_element_type=f32) + b, 0.0)
    w, b = wb(l_w2)
    stats = jnp.dot(w, hl.astype(cdt), preferred_element_type=f32) + b  # (2Z, 1)
    row = jax.lax.broadcasted_iota(jnp.int32, stats.shape, 0)
    lat = jnp.where(row < zdim, stats, 0.1 + 0.9 * jax.nn.sigmoid(stats))
    lat_ref[0] = lat                                                   # one full store
    mu = lat[0:zdim, :]
    sigma = lat[zdim:2 * zdim, :]
    z = mu + sigma * eps_ref[0].astype(f32)                            # rsample (Z, 1)

    # ---- Decoder: [x; 1] columns + projected z, fused ctx+tgt point set ------
    z_proj = jnp.dot(d_wz[...], z.astype(cdt), preferred_element_type=f32)  # (H, 1)
    xs = x_ref[0]                                                      # (x+1, Np)
    hd = jnp.dot(d_w1x[...], xs, preferred_element_type=f32)           # bias via ones row
    hd = jnp.maximum(hd + z_proj, 0.0).astype(cdt)                     # lane broadcast of z
    w, b = wb(d_w2)
    hd = jnp.maximum(jnp.dot(w, hd, preferred_element_type=f32) + b, 0.0).astype(cdt)
    w, b = wb(d_w3)
    out = jnp.dot(w, hd, preferred_element_type=f32) + b               # (2Y, Np) = [mu; sig_raw]
    row = jax.lax.broadcasted_iota(jnp.int32, out.shape, 0)
    pred_ref[0] = jnp.where(row < ydim, out, 0.1 + 0.9 * jax.nn.softplus(out))


# ----------------------------------------------------------------------------
# Weight packing: 20 logical tensors -> 9 transposed (W|b) slabs, compute dtype.
# ----------------------------------------------------------------------------
def pack_params(params, dtype):
    (e_w1, e_b1, e_w2, e_b2, e_w3, e_b3,
     l_w1, l_b1, l_wmu, l_bmu, l_wls, l_bls,
     d_w1, d_b1, d_w2, d_b2, d_wmu, d_bmu, d_wsig, d_bsig) = params

    def t(w, b):  # (in, out), (1, out) -> transposed packed (out, in+1)
        return jnp.concatenate([w.T, b.T], axis=1).astype(dtype)

    enc1 = t(e_w1, e_b1)                                              # (H, x+y+1)
    enc2 = t(e_w2, e_b2)                                              # (H, H+1)
    enc3 = t(e_w3, e_b3)                                              # (R, H+1)
    lat1 = t(l_w1, l_b1)                                              # (H, R+1)
    lat2 = t(jnp.concatenate([l_wmu, l_wls], axis=1),
             jnp.concatenate([l_bmu, l_bls], axis=1))                 # (2Z, H+1)
    d_wx, d_wz = d_w1[:X_DIM], d_w1[X_DIM:]
    dec1x = t(d_wx, d_b1)                                             # (H, x+1)
    dwz = d_wz.T.astype(dtype)                                        # (H, Z)
    dec2 = t(d_w2, d_b2)                                              # (H, H+1)
    dec3 = t(jnp.concatenate([d_wmu, d_wsig], axis=1),
             jnp.concatenate([d_bmu, d_bsig], axis=1))                # (2Y, H+1)
    return [enc1, enc2, enc3, lat1, lat2, dec1x, dwz, dec2, dec3]


# ----------------------------------------------------------------------------
# Wrapper: host-side feature-major packing, BlockSpecs, grid, result unpacking.
# ----------------------------------------------------------------------------
def neural_process_forward(params, context_x, context_y, target_x, eps,
                           *, compute_dtype=jnp.bfloat16, vmem_limit_bytes=None):
    kparams = pack_params(params, compute_dtype)
    B, Nc, x_dim = context_x.shape
    _, _, y_dim = context_y.shape
    _, Nt, _ = target_x.shape
    z_dim = eps.shape[-1]
    Np = Nc + Nt
    y2, z2 = 2 * y_dim, 2 * z_dim
    H, R = kparams[0].shape[0], kparams[2].shape[0]
    cdt = compute_dtype

    # Host-side layout: feature-major point tensors (features x points) so the
    # point axis sits on the 128-wide lane dim; the constant-1 row folds the
    # first-layer biases.  Context and target points are fused for the decoder.
    cxyT = jnp.concatenate(
        [context_x, context_y, jnp.ones((B, Nc, 1), context_x.dtype)],
        axis=-1).astype(cdt).transpose(0, 2, 1)                       # (B, x+y+1, Nc)
    all_x = jnp.concatenate([context_x, target_x], axis=1)
    xT = jnp.concatenate([all_x, jnp.ones((B, Np, 1), all_x.dtype)],
                         axis=-1).astype(cdt).transpose(0, 2, 1)      # (B, x+1, Np)
    epsT = eps.reshape(B, z_dim, 1).astype(jnp.float32)               # (B, Z, 1)

    def pts_spec(arr):
        s = arr.shape
        return pl.BlockSpec((1, s[1], s[2]), lambda b: (b, 0, 0))

    def w_spec(w):
        # Constant index_map: fetched once, stays resident across all grid steps.
        return pl.BlockSpec(w.shape, lambda b: (0, 0))

    in_specs = ([pts_spec(cxyT), pts_spec(xT), pts_spec(epsT)]
                + [w_spec(w) for w in kparams])
    out_shape = (
        jax.ShapeDtypeStruct((B, z2, 1), jnp.float32),    # [mu ; sigma]
        jax.ShapeDtypeStruct((B, y2, Np), jnp.float32),   # [pred_mu ; pred_sigma]
    )
    out_specs = (pl.BlockSpec((1, z2, 1), lambda b: (b, 0, 0)),
                 pl.BlockSpec((1, y2, Np), lambda b: (b, 0, 0)))

    # advisory cost estimate so XLA schedules the small custom call sensibly
    flops = 2 * B * (
        Nc * ((x_dim + y_dim + 1) * H + (H + 1) * H + (H + 1) * R)
        + (R + 1) * H + (H + 1) * z2 + z_dim * H
        + Np * ((x_dim + 1) * H + (H + 1) * H + (H + 1) * y2))
    transcendentals = B * (z2 + Np * y2)
    wbytes = kparams[0].dtype.itemsize
    nbytes = (wbytes * (cxyT.size + xT.size + sum(int(w.size) for w in kparams))
              + 4 * (epsT.size + B * (z2 + y2 * Np)))

    lat, predT = pl.pallas_call(
        neural_process_kernel,
        out_shape=out_shape,
        grid=(B,),
        in_specs=in_specs,
        out_specs=out_specs,
        compiler_params=pltpu.CompilerParams(
            dimension_semantics=("parallel",),
            vmem_limit_bytes=vmem_limit_bytes),
        cost_estimate=pl.CostEstimate(flops=int(flops),
                                      transcendentals=int(transcendentals),
                                      bytes_accessed=int(nbytes)),
    )(cxyT, xT, epsT, *kparams)

    lat = lat[:, :, 0]                                    # (B, 2Z)
    context_mu = lat[:, :z_dim]
    context_sigma = lat[:, z_dim:]
    pred = predT.transpose(0, 2, 1)                       # (B, Np, 2Y)
    c_pmu, c_psig = pred[:, :Nc, :y_dim], pred[:, :Nc, y_dim:]
    t_pmu, t_psig = pred[:, Nc:, :y_dim], pred[:, Nc:, y_dim:]

    # TODO(synk): utils.logits_from_pred_mu source unavailable; using a
    # flatten-to-(batch, -1) view of pred_mu as the logits.
    logits = {"context": c_pmu.reshape(B, -1), "target": t_pmu.reshape(B, -1)}
    p_y_pred = (t_pmu, t_psig)               # Normal(mu, sigma) as (mu, sigma)
    q_context = (context_mu, context_sigma)
    q_target = None                           # eval mode
    loss = None                               # eval mode
    return context_mu, logits, p_y_pred, q_target, q_context, loss, (c_pmu, c_psig)


# ----------------------------------------------------------------------------
# Deterministic parameter init (PyTorch nn.Linear-style uniform), logical layout.
# ----------------------------------------------------------------------------
def init_params(key):
    def linear(k, fan_in, fan_out):
        kw, kb = jax.random.split(k)
        bound = 1.0 / np.sqrt(fan_in)
        w = jax.random.uniform(kw, (fan_in, fan_out), jnp.float32, -bound, bound)
        b = jax.random.uniform(kb, (1, fan_out), jnp.float32, -bound, bound)
        return w, b

    keys = jax.random.split(key, 10)
    e_w1, e_b1 = linear(keys[0], X_DIM + Y_DIM, H_DIM)
    e_w2, e_b2 = linear(keys[1], H_DIM, H_DIM)
    e_w3, e_b3 = linear(keys[2], H_DIM, R_DIM)
    l_w1, l_b1 = linear(keys[3], R_DIM, H_DIM)
    l_wmu, l_bmu = linear(keys[4], H_DIM, Z_DIM)
    l_wls, l_bls = linear(keys[5], H_DIM, Z_DIM)
    d_w1, d_b1 = linear(keys[6], X_DIM + Z_DIM, H_DIM)
    d_w2, d_b2 = linear(keys[7], H_DIM, H_DIM)
    d_wmu, d_bmu = linear(keys[8], H_DIM, Y_DIM)
    d_wsig, d_bsig = linear(keys[9], H_DIM, Y_DIM)
    return [e_w1, e_b1, e_w2, e_b2, e_w3, e_b3,
            l_w1, l_b1, l_wmu, l_bmu, l_wls, l_bls,
            d_w1, d_b1, d_w2, d_b2, d_wmu, d_bmu, d_wsig, d_bsig]


# Pure-JAX reference (same math, f32) for correctness checking.
def reference_forward(params, context_x, context_y, target_x, eps):
    (e_w1, e_b1, e_w2, e_b2, e_w3, e_b3,
     l_w1, l_b1, l_wmu, l_bmu, l_wls, l_bls,
     d_w1, d_b1, d_w2, d_b2, d_wmu, d_bmu, d_wsig, d_bsig) = params
    xy = jnp.concatenate([context_x, context_y], axis=-1)
    h = jax.nn.relu(xy @ e_w1 + e_b1)
    h = jax.nn.relu(h @ e_w2 + e_b2)
    r = jnp.mean(h @ e_w3 + e_b3, axis=1)                        # (B, r)
    hl = jax.nn.relu(r @ l_w1 + l_b1)
    mu = hl @ l_wmu + l_bmu
    sigma = 0.1 + 0.9 * jax.nn.sigmoid(hl @ l_wls + l_bls)
    z = mu + sigma * eps

    def decode(x):
        zb = jnp.broadcast_to(z[:, None, :], (x.shape[0], x.shape[1], z.shape[-1]))
        xz = jnp.concatenate([x, zb], axis=-1)
        hd = jax.nn.relu(xz @ d_w1 + d_b1)
        hd = jax.nn.relu(hd @ d_w2 + d_b2)
        return hd @ d_wmu + d_bmu, 0.1 + 0.9 * jax.nn.softplus(hd @ d_wsig + d_bsig)

    c_pmu, c_psig = decode(context_x)
    t_pmu, t_psig = decode(target_x)
    return mu, sigma, c_pmu, c_psig, t_pmu, t_psig


def check_against_reference(outs, ref, rtol, atol):
    (context_mu, logits, p_y_pred, q_target, q_context, loss, ctx_pred) = outs
    ref_mu, ref_sigma, ref_cpmu, ref_cpsig, ref_tpmu, ref_tpsig = ref
    np.testing.assert_allclose(np.asarray(context_mu), np.asarray(ref_mu), rtol=rtol, atol=atol)
    np.testing.assert_allclose(np.asarray(q_context[1]), np.asarray(ref_sigma), rtol=rtol, atol=atol)
    np.testing.assert_allclose(np.asarray(ctx_pred[0]), np.asarray(ref_cpmu), rtol=rtol, atol=atol)
    np.testing.assert_allclose(np.asarray(ctx_pred[1]), np.asarray(ref_cpsig), rtol=rtol, atol=atol)
    np.testing.assert_allclose(np.asarray(p_y_pred[0]), np.asarray(ref_tpmu), rtol=rtol, atol=atol)
    np.testing.assert_allclose(np.asarray(p_y_pred[1]), np.asarray(ref_tpsig), rtol=rtol, atol=atol)
    assert q_target is None and loss is None


if __name__ == "__main__":
    key = jax.random.PRNGKey(0)
    kp, kcx, kcy, ktx, keps = jax.random.split(key, 5)
    B, Nc, Nt = 4, 16, 16        # Nc/Nt kept small; points ride the lane dim

    params = init_params(kp)
    context_x = jax.random.normal(kcx, (B, Nc, X_DIM), jnp.float32)
    context_y = jax.random.normal(kcy, (B, Nc, Y_DIM), jnp.float32)
    target_x = jax.random.normal(ktx, (B, Nt, X_DIM), jnp.float32)
    eps = jax.random.normal(keps, (B, Z_DIM), jnp.float32)      # rsample noise

    ref = reference_forward(params, context_x, context_y, target_x, eps)
    jax.block_until_ready(ref)

    # f32 matmul path: tight structural check against the f32 reference.
    outs_f32 = neural_process_forward(params, context_x, context_y, target_x, eps,
                                      compute_dtype=jnp.float32)
    jax.block_until_ready(jax.tree_util.tree_leaves(outs_f32))
    check_against_reference(outs_f32, ref, rtol=5e-3, atol=5e-4)

    # bf16 matmul path (production MXU config on v5e/v6e/v7x): loose check.
    outs_bf16 = neural_process_forward(params, context_x, context_y, target_x, eps,
                                       compute_dtype=jnp.bfloat16)
    jax.block_until_ready(jax.tree_util.tree_leaves(outs_bf16))
    check_against_reference(outs_bf16, ref, rtol=1e-1, atol=1e-1)

    logits = outs_f32[1]
    assert logits["target"].shape == (B, Nt * Y_DIM)
    assert logits["context"].shape == (B, Nc * Y_DIM)
    print("KERNEL_OK")
</pallas_src>

<mosaic_0001>
module attributes {stable_mosaic.version = 11 : i64} {
  func.func @neural_process_kernel(%arg0: i32, %arg1: memref<1x4x16xf32, #tpu.memory_space<vmem>>, %arg2: memref<1x3x32xf32, #tpu.memory_space<vmem>>, %arg3: memref<1x32x1xf32, #tpu.memory_space<vmem>>, %arg4: memref<32x4xf32, #tpu.memory_space<vmem>>, %arg5: memref<32x33xf32, #tpu.memory_space<vmem>>, %arg6: memref<32x33xf32, #tpu.memory_space<vmem>>, %arg7: memref<32x33xf32, #tpu.memory_space<vmem>>, %arg8: memref<64x33xf32, #tpu.memory_space<vmem>>, %arg9: memref<32x3xf32, #tpu.memory_space<vmem>>, %arg10: memref<32x32xf32, #tpu.memory_space<vmem>>, %arg11: memref<32x33xf32, #tpu.memory_space<vmem>>, %arg12: memref<2x33xf32, #tpu.memory_space<vmem>>, %arg13: memref<1x64x1xf32, #tpu.memory_space<vmem>>, %arg14: memref<1x2x32xf32, #tpu.memory_space<vmem>>) attributes {dimension_semantics = [#tpu.dimension_semantics<parallel>], iteration_bounds = array<i64: 4>, scalar_prefetch = 0 : i64, scratch_operands = 0 : i64, tpu.core_type = #tpu.core_type<tc>, window_params = [{transform_indices = @transform_0, window_bounds = array<i64: 1, 4, 16>}, {transform_indices = @transform_1, window_bounds = array<i64: 1, 3, 32>}, {transform_indices = @transform_2, window_bounds = array<i64: 1, 32, 1>}, {pipeline_mode = #tpu.pipeline_mode<synchronous>, transform_indices = @transform_3, window_bounds = array<i64: 32, 4>}, {pipeline_mode = #tpu.pipeline_mode<synchronous>, transform_indices = @transform_4, window_bounds = array<i64: 32, 33>}, {pipeline_mode = #tpu.pipeline_mode<synchronous>, transform_indices = @transform_5, window_bounds = array<i64: 32, 33>}, {pipeline_mode = #tpu.pipeline_mode<synchronous>, transform_indices = @transform_6, window_bounds = array<i64: 32, 33>}, {pipeline_mode = #tpu.pipeline_mode<synchronous>, transform_indices = @transform_7, window_bounds = array<i64: 64, 33>}, {pipeline_mode = #tpu.pipeline_mode<synchronous>, transform_indices = @transform_8, window_bounds = array<i64: 32, 3>}, {pipeline_mode = #tpu.pipeline_mode<synchronous>, transform_indices = @transform_9, window_bounds = array<i64: 32, 32>}, {pipeline_mode = #tpu.pipeline_mode<synchronous>, transform_indices = @transform_10, window_bounds = array<i64: 32, 33>}, {pipeline_mode = #tpu.pipeline_mode<synchronous>, transform_indices = @transform_11, window_bounds = array<i64: 2, 33>}, {transform_indices = @transform_12, window_bounds = array<i64: 1, 64, 1>}, {transform_indices = @transform_13, window_bounds = array<i64: 1, 2, 32>}]} {
    %c0 = arith.constant 0 : index
    %c0_0 = arith.constant 0 : index
    %c0_1 = arith.constant 0 : index
    %0 = vector.load %arg1[%c0, %c0_0, %c0_1] : memref<1x4x16xf32, #tpu.memory_space<vmem>>, vector<1x4x16xf32>
    %1 = vector.shape_cast %0 : vector<1x4x16xf32> to vector<4x16xf32>
    %c0_2 = arith.constant 0 : index
    %c0_3 = arith.constant 0 : index
    %2 = vector.load %arg4[%c0_2, %c0_3] : memref<32x4xf32, #tpu.memory_space<vmem>>, vector<32x4xf32>
    %cst = arith.constant dense<0.000000e+00> : vector<32x16xf32>
    %3 = tpu.matmul %2, %1, %cst {dimension_numbers = #tpu.dot_dimension_numbers<[1], [0], [0], [1], [0, 0, 1, 1], [], []>} : vector<32x4xf32>, vector<4x16xf32>, vector<32x16xf32> -> vector<32x16xf32>
    %cst_4 = arith.constant 0.000000e+00 : f32
    %4 = vector.broadcast %cst_4 : f32 to vector<32x16xf32>
    %5 = arith.maximumf %3, %4 : vector<32x16xf32>
    %c0_5 = arith.constant 0 : index
    %c0_6 = arith.constant 0 : index
    %6 = vector.load %arg5[%c0_5, %c0_6] : memref<32x33xf32, #tpu.memory_space<vmem>>, vector<32x32xf32>
    %c0_7 = arith.constant 0 : index
    %c32 = arith.constant 32 : index
    %7 = vector.load %arg5[%c0_7, %c32] : memref<32x33xf32, #tpu.memory_space<vmem>>, vector<32x1xf32>
    %cst_8 = arith.constant dense<0.000000e+00> : vector<32x16xf32>
    %8 = tpu.matmul %6, %5, %cst_8 {dimension_numbers = #tpu.dot_dimension_numbers<[1], [0], [0], [1], [0, 0, 1, 1], [], []>} : vector<32x32xf32>, vector<32x16xf32>, vector<32x16xf32> -> vector<32x16xf32>
    %9 = vector.broadcast %7 : vector<32x1xf32> to vector<32x16xf32>
    %10 = arith.addf %8, %9 : vector<32x16xf32>
    %cst_9 = arith.constant 0.000000e+00 : f32
    %11 = vector.broadcast %cst_9 : f32 to vector<32x16xf32>
    %12 = arith.maximumf %10, %11 : vector<32x16xf32>
    %c0_10 = arith.constant 0 : index
    %c0_11 = arith.constant 0 : index
    %13 = vector.load %arg6[%c0_10, %c0_11] : memref<32x33xf32, #tpu.memory_space<vmem>>, vector<32x32xf32>
    %c0_12 = arith.constant 0 : index
    %c32_13 = arith.constant 32 : index
    %14 = vector.load %arg6[%c0_12, %c32_13] : memref<32x33xf32, #tpu.memory_space<vmem>>, vector<32x1xf32>
    %cst_14 = arith.constant dense<0.000000e+00> : vector<32x16xf32>
    %15 = tpu.matmul %13, %12, %cst_14 {dimension_numbers = #tpu.dot_dimension_numbers<[1], [0], [0], [1], [0, 0, 1, 1], [], []>} : vector<32x32xf32>, vector<32x16xf32>, vector<32x16xf32> -> vector<32x16xf32>
    %16 = vector.broadcast %14 : vector<32x1xf32> to vector<32x16xf32>
    %17 = arith.addf %15, %16 : vector<32x16xf32>
    %cst_15 = arith.constant dense<0.000000e+00> : vector<32xf32>
    %18 = vector.multi_reduction <add>, %17, %cst_15 [1] : vector<32x16xf32> to vector<32xf32>
    %19 = vector.shape_cast %18 : vector<32xf32> to vector<32x1xf32>
    %cst_16 = arith.constant 1.600000e+01 : f32
    %20 = vector.broadcast %cst_16 : f32 to vector<32x1xf32>
    %21 = arith.divf %19, %20 : vector<32x1xf32>
    %c0_17 = arith.constant 0 : index
    %c0_18 = arith.constant 0 : index
    %22 = vector.load %arg7[%c0_17, %c0_18] : memref<32x33xf32, #tpu.memory_space<vmem>>, vector<32x32xf32>
    %c0_19 = arith.constant 0 : index
    %c32_20 = arith.constant 32 : index
    %23 = vector.load %arg7[%c0_19, %c32_20] : memref<32x33xf32, #tpu.memory_space<vmem>>, vector<32x1xf32>
    %cst_21 = arith.constant dense<0.000000e+00> : vector<32x1xf32>
    %24 = tpu.matmul %22, %21, %cst_21 {dimension_numbers = #tpu.dot_dimension_numbers<[1], [0], [0], [1], [0, 0, 1, 1], [], []>} : vector<32x32xf32>, vector<32x1xf32>, vector<32x1xf32> -> vector<32x1xf32>
    %25 = arith.addf %24, %23 : vector<32x1xf32>
    %cst_22 = arith.constant 0.000000e+00 : f32
    %26 = vector.broadcast %cst_22 : f32 to vector<32x1xf32>
    %27 = arith.maximumf %25, %26 : vector<32x1xf32>
    %c0_23 = arith.constant 0 : index
    %c0_24 = arith.constant 0 : index
    %28 = vector.load %arg8[%c0_23, %c0_24] : memref<64x33xf32, #tpu.memory_space<vmem>>, vector<64x32xf32>
    %c0_25 = arith.constant 0 : index
    %c32_26 = arith.constant 32 : index
    %29 = vector.load %arg8[%c0_25, %c32_26] : memref<64x33xf32, #tpu.memory_space<vmem>>, vector<64x1xf32>
    %cst_27 = arith.constant dense<0.000000e+00> : vector<64x1xf32>
    %30 = tpu.matmul %28, %27, %cst_27 {dimension_numbers = #tpu.dot_dimension_numbers<[1], [0], [0], [1], [0, 0, 1, 1], [], []>} : vector<64x32xf32>, vector<32x1xf32>, vector<64x1xf32> -> vector<64x1xf32>
    %31 = arith.addf %30, %29 : vector<64x1xf32>
    %32 = tpu.iota {dimensions = array<i32: 0>} : vector<64x1xi32>
    %c32_i32 = arith.constant 32 : i32
    %33 = vector.broadcast %c32_i32 : i32 to vector<64x1xi32>
    %34 = arith.cmpi slt, %32, %33 : vector<64x1xi32>
    %35 = arith.negf %31 : vector<64x1xf32>
    %36 = math.exp %35 : vector<64x1xf32>
    %cst_28 = arith.constant 1.000000e+00 : f32
    %37 = vector.broadcast %cst_28 : f32 to vector<64x1xf32>
    %38 = arith.addf %37, %36 : vector<64x1xf32>
    %39 = arith.divf %37, %38 : vector<64x1xf32>
    %cst_29 = arith.constant 0.899999976 : f32
    %40 = vector.broadcast %cst_29 : f32 to vector<64x1xf32>
    %41 = arith.mulf %40, %39 : vector<64x1xf32>
    %cst_30 = arith.constant 1.000000e-01 : f32
    %42 = vector.broadcast %cst_30 : f32 to vector<64x1xf32>
    %43 = arith.addf %42, %41 : vector<64x1xf32>
    %44 = arith.select %34, %31, %43 : vector<64x1xi1>, vector<64x1xf32>
    %c0_31 = arith.constant 0 : index
    %c0_32 = arith.constant 0 : index
    %c0_33 = arith.constant 0 : index
    %45 = vector.load %arg13[%c0_31, %c0_32, %c0_33] : memref<1x64x1xf32, #tpu.memory_space<vmem>>, vector<1x64x1xf32>
    %46 = vector.shape_cast %45 : vector<1x64x1xf32> to vector<64x1xf32>
    %47 = vector.shape_cast %44 : vector<64x1xf32> to vector<1x64x1xf32>
    tpu.vector_store %arg13[%c0_31, %c0_32, %c0_33], %47 {strides = array<i32>} : memref<1x64x1xf32, #tpu.memory_space<vmem>>, vector<1x64x1xf32>,
    %48 = vector.extract_strided_slice %44 {offsets = [0, 0], sizes = [32, 1], strides = [1, 1]} : vector<64x1xf32> to vector<32x1xf32>
    %49 = vector.extract_strided_slice %44 {offsets = [32, 0], sizes = [32, 1], strides = [1, 1]} : vector<64x1xf32> to vector<32x1xf32>
    %c0_34 = arith.constant 0 : index
    %c0_35 = arith.constant 0 : index
    %c0_36 = arith.constant 0 : index
    %50 = vector.load %arg3[%c0_34, %c0_35, %c0_36] : memref<1x32x1xf32, #tpu.memory_space<vmem>>, vector<1x32x1xf32>
    %51 = vector.shape_cast %50 : vector<1x32x1xf32> to vector<32x1xf32>
    %52 = arith.mulf %49, %51 : vector<32x1xf32>
    %53 = arith.addf %48, %52 : vector<32x1xf32>
    %c0_37 = arith.constant 0 : index
    %c0_38 = arith.constant 0 : index
    %54 = vector.load %arg10[%c0_37, %c0_38] : memref<32x32xf32, #tpu.memory_space<vmem>>, vector<32x32xf32>
    %cst_39 = arith.constant dense<0.000000e+00> : vector<32x1xf32>
    %55 = tpu.matmul %54, %53, %cst_39 {dimension_numbers = #tpu.dot_dimension_numbers<[1], [0], [0], [1], [0, 0, 1, 1], [], []>} : vector<32x32xf32>, vector<32x1xf32>, vector<32x1xf32> -> vector<32x1xf32>
    %c0_40 = arith.constant 0 : index
    %c0_41 = arith.constant 0 : index
    %c0_42 = arith.constant 0 : index
    %56 = vector.load %arg2[%c0_40, %c0_41, %c0_42] : memref<1x3x32xf32, #tpu.memory_space<vmem>>, vector<1x3x32xf32>
    %57 = vector.shape_cast %56 : vector<1x3x32xf32> to vector<3x32xf32>
    %c0_43 = arith.constant 0 : index
    %c0_44 = arith.constant 0 : index
    %58 = vector.load %arg9[%c0_43, %c0_44] : memref<32x3xf32, #tpu.memory_space<vmem>>, vector<32x3xf32>
    %cst_45 = arith.constant dense<0.000000e+00> : vector<32x32xf32>
    %59 = tpu.matmul %58, %57, %cst_45 {dimension_numbers = #tpu.dot_dimension_numbers<[1], [0], [0], [1], [0, 0, 1, 1], [], []>} : vector<32x3xf32>, vector<3x32xf32>, vector<32x32xf32> -> vector<32x32xf32>
    %60 = vector.broadcast %55 : vector<32x1xf32> to vector<32x32xf32>
    %61 = arith.addf %59, %60 : vector<32x32xf32>
    %cst_46 = arith.constant 0.000000e+00 : f32
    %62 = vector.broadcast %cst_46 : f32 to vector<32x32xf32>
    %63 = arith.maximumf %61, %62 : vector<32x32xf32>
    %c0_47 = arith.constant 0 : index
    %c0_48 = arith.constant 0 : index
    %64 = vector.load %arg11[%c0_47, %c0_48] : memref<32x33xf32, #tpu.memory_space<vmem>>, vector<32x32xf32>
    %c0_49 = arith.constant 0 : index
    %c32_50 = arith.constant 32 : index
    %65 = vector.load %arg11[%c0_49, %c32_50] : memref<32x33xf32, #tpu.memory_space<vmem>>, vector<32x1xf32>
    %cst_51 = arith.constant dense<0.000000e+00> : vector<32x32xf32>
    %66 = tpu.matmul %64, %63, %cst_51 {dimension_numbers = #tpu.dot_dimension_numbers<[1], [0], [0], [1], [0, 0, 1, 1], [], []>} : vector<32x32xf32>, vector<32x32xf32>, vector<32x32xf32> -> vector<32x32xf32>
    %67 = vector.broadcast %65 : vector<32x1xf32> to vector<32x32xf32>
    %68 = arith.addf %66, %67 : vector<32x32xf32>
    %cst_52 = arith.constant 0.000000e+00 : f32
    %69 = vector.broadcast %cst_52 : f32 to vector<32x32xf32>
    %70 = arith.maximumf %68, %69 : vector<32x32xf32>
    %c0_53 = arith.constant 0 : index
    %c0_54 = arith.constant 0 : index
    %71 = vector.load %arg12[%c0_53, %c0_54] : memref<2x33xf32, #tpu.memory_space<vmem>>, vector<2x32xf32>
    %c0_55 = arith.constant 0 : index
    %c32_56 = arith.constant 32 : index
    %72 = vector.load %arg12[%c0_55, %c32_56] : memref<2x33xf32, #tpu.memory_space<vmem>>, vector<2x1xf32>
    %cst_57 = arith.constant dense<0.000000e+00> : vector<2x32xf32>
    %73 = tpu.matmul %71, %70, %cst_57 {dimension_numbers = #tpu.dot_dimension_numbers<[1], [0], [0], [1], [0, 0, 1, 1], [], []>} : vector<2x32xf32>, vector<32x32xf32>, vector<2x32xf32> -> vector<2x32xf32>
    %74 = vector.broadcast %72 : vector<2x1xf32> to vector<2x32xf32>
    %75 = arith.addf %73, %74 : vector<2x32xf32>
    %76 = tpu.iota {dimensions = array<i32: 0>} : vector<2x32xi32>
    %c1_i32 = arith.constant 1 : i32
    %77 = vector.broadcast %c1_i32 : i32 to vector<2x32xi32>
    %78 = arith.cmpi slt, %76, %77 : vector<2x32xi32>
    %cst_58 = arith.constant 0.000000e+00 : f32
    %79 = vector.broadcast %cst_58 : f32 to vector<2x32xf32>
    %80 = arith.maximumf %75, %79 : vector<2x32xf32>
    %81 = vector.broadcast %cst_58 : f32 to vector<2x32xf32>
    %82 = arith.subf %75, %81 : vector<2x32xf32>
    %83 = arith.cmpf one, %82, %82 : vector<2x32xf32>
    %84 = vector.broadcast %cst_58 : f32 to vector<2x32xf32>
    %85 = arith.addf %75, %84 : vector<2x32xf32>
    %86 = math.absf %82 : vector<2x32xf32>
    %cst_59 = arith.constant 0.000000e+00 : f32
    %87 = vector.broadcast %cst_59 : f32 to vector<2x32xf32>
    %88 = arith.subf %87, %86 : vector<2x32xf32>
    %89 = math.exp %88 : vector<2x32xf32>
    %90 = math.log1p %89 : vector<2x32xf32>
    %91 = arith.addf %80, %90 : vector<2x32xf32>
    %92 = arith.select %83, %85, %91 : vector<2x32xi1>, vector<2x32xf32>
    %cst_60 = arith.constant 0.899999976 : f32
    %93 = vector.broadcast %cst_60 : f32 to vector<2x32xf32>
    %94 = arith.mulf %93, %92 : vector<2x32xf32>
    %cst_61 = arith.constant 1.000000e-01 : f32
    %95 = vector.broadcast %cst_61 : f32 to vector<2x32xf32>
    %96 = arith.addf %95, %94 : vector<2x32xf32>
    %97 = arith.select %78, %75, %96 : vector<2x32xi1>, vector<2x32xf32>
    %c0_62 = arith.constant 0 : index
    %c0_63 = arith.constant 0 : index
    %c0_64 = arith.constant 0 : index
    %98 = vector.load %arg14[%c0_62, %c0_63, %c0_64] : memref<1x2x32xf32, #tpu.memory_space<vmem>>, vector<1x2x32xf32>
    %99 = vector.shape_cast %98 : vector<1x2x32xf32> to vector<2x32xf32>
    %100 = vector.shape_cast %97 : vector<2x32xf32> to vector<1x2x32xf32>
    tpu.vector_store %arg14[%c0_62, %c0_63, %c0_64], %100 {strides = array<i32>} : memref<1x2x32xf32, #tpu.memory_space<vmem>>, vector<1x2x32xf32>,
    return
  }
  func.func @transform_0(%arg0: i32) -> (i32, i32, i32) {
    %c0_i32 = arith.constant 0 : i32
    %c0_i32_0 = arith.constant 0 : i32
    %c0_i32_1 = arith.constant 0 : i32
    return %arg0, %c0_i32, %c0_i32_0 : i32, i32, i32
  }
  func.func @transform_1(%arg0: i32) -> (i32, i32, i32) {
    %c0_i32 = arith.constant 0 : i32
    %c0_i32_0 = arith.constant 0 : i32
    %c0_i32_1 = arith.constant 0 : i32
    return %arg0, %c0_i32, %c0_i32_0 : i32, i32, i32
  }
  func.func @transform_2(%arg0: i32) -> (i32, i32, i32) {
    %c0_i32 = arith.constant 0 : i32
    %c0_i32_0 = arith.constant 0 : i32
    %c0_i32_1 = arith.constant 0 : i32
    return %arg0, %c0_i32, %c0_i32_0 : i32, i32, i32
  }
  func.func @transform_3(%arg0: i32) -> (i32, i32) {
    %c0_i32 = arith.constant 0 : i32
    %c0_i32_0 = arith.constant 0 : i32
    %c0_i32_1 = arith.constant 0 : i32
    return %c0_i32, %c0_i32_0 : i32, i32
  }
  func.func @transform_4(%arg0: i32) -> (i32, i32) {
    %c0_i32 = arith.constant 0 : i32
    %c0_i32_0 = arith.constant 0 : i32
    %c0_i32_1 = arith.constant 0 : i32
    return %c0_i32, %c0_i32_0 : i32, i32
  }
  func.func @transform_5(%arg0: i32) -> (i32, i32) {
    %c0_i32 = arith.constant 0 : i32
    %c0_i32_0 = arith.constant 0 : i32
    %c0_i32_1 = arith.constant 0 : i32
    return %c0_i32, %c0_i32_0 : i32, i32
  }
  func.func @transform_6(%arg0: i32) -> (i32, i32) {
    %c0_i32 = arith.constant 0 : i32
    %c0_i32_0 = arith.constant 0 : i32
    %c0_i32_1 = arith.constant 0 : i32
    return %c0_i32, %c0_i32_0 : i32, i32
  }
  func.func @transform_7(%arg0: i32) -> (i32, i32) {
    %c0_i32 = arith.constant 0 : i32
    %c0_i32_0 = arith.constant 0 : i32
    %c0_i32_1 = arith.constant 0 : i32
    return %c0_i32, %c0_i32_0 : i32, i32
  }
  func.func @transform_8(%arg0: i32) -> (i32, i32) {
    %c0_i32 = arith.constant 0 : i32
    %c0_i32_0 = arith.constant 0 : i32
    %c0_i32_1 = arith.constant 0 : i32
    return %c0_i32, %c0_i32_0 : i32, i32
  }
  func.func @transform_9(%arg0: i32) -> (i32, i32) {
    %c0_i32 = arith.constant 0 : i32
    %c0_i32_0 = arith.constant 0 : i32
    %c0_i32_1 = arith.constant 0 : i32
    return %c0_i32, %c0_i32_0 : i32, i32
  }
  func.func @transform_10(%arg0: i32) -> (i32, i32) {
    %c0_i32 = arith.constant 0 : i32
    %c0_i32_0 = arith.constant 0 : i32
    %c0_i32_1 = arith.constant 0 : i32
    return %c0_i32, %c0_i32_0 : i32, i32
  }
  func.func @transform_11(%arg0: i32) -> (i32, i32) {
    %c0_i32 = arith.constant 0 : i32
    %c0_i32_0 = arith.constant 0 : i32
    %c0_i32_1 = arith.constant 0 : i32
    return %c0_i32, %c0_i32_0 : i32, i32
  }
  func.func @transform_12(%arg0: i32) -> (i32, i32, i32) {
    %c0_i32 = arith.constant 0 : i32
    %c0_i32_0 = arith.constant 0 : i32
    %c0_i32_1 = arith.constant 0 : i32
    return %arg0, %c0_i32, %c0_i32_0 : i32, i32, i32
  }
  func.func @transform_13(%arg0: i32) -> (i32, i32, i32) {
    %c0_i32 = arith.constant 0 : i32
    %c0_i32_0 = arith.constant 0 : i32
    %c0_i32_1 = arith.constant 0 : i32
    return %arg0, %c0_i32, %c0_i32_0 : i32, i32, i32
  }
}

</mosaic_0001>

<llo_original>
// kernel: tpu_custom_call.1
$region0: #{tpu_custom_call.1}
  #allocation0 [shape = 'u32[]', space=smem, size = 0x4, offset = 0x4, fixed_abs, tag = 'smem constant byte address 0x4 - core index']
  #allocation1 [shape = 'u32[144,128]{1,0:T(1,128)}', space=vmem, size = 0x12000, scoped, tag = 'internal scratch']
  %s0 = inlined_call_operand.vmem [shape: f32[4,4,16], index: 0, kind: input, shape index: {}]
  %s1 = inlined_call_operand.vmem [shape: f32[4,3,32], index: 1, kind: input, shape index: {}]
  %s2 = inlined_call_operand.vmem [shape: f32[4,32,1], index: 2, kind: input, shape index: {}]
  %s3 = inlined_call_operand.vmem [shape: f32[32,4], index: 3, kind: input, shape index: {}]
  %s4 = inlined_call_operand.vmem [shape: f32[32,33], index: 4, kind: input, shape index: {}]
  %s5 = inlined_call_operand.vmem [shape: f32[32,33], index: 5, kind: input, shape index: {}]
  %s6 = inlined_call_operand.vmem [shape: f32[32,33], index: 6, kind: input, shape index: {}]
  %s7 = inlined_call_operand.vmem [shape: f32[64,33], index: 7, kind: input, shape index: {}]
  %s8 = inlined_call_operand.vmem [shape: f32[32,3], index: 8, kind: input, shape index: {}]
  %s9 = inlined_call_operand.vmem [shape: f32[32,32], index: 9, kind: input, shape index: {}]
  %s10 = inlined_call_operand.vmem [shape: f32[32,33], index: 10, kind: input, shape index: {}]
  %s11 = inlined_call_operand.vmem [shape: f32[2,33], index: 11, kind: input, shape index: {}]
  %s12 = inlined_call_operand.vmem [shape: f32[4,64,1], index: 12, kind: output, shape index: {0}]
  %s13 = inlined_call_operand.hbm [shape: f32[4,2,32], index: 13, kind: output, shape index: {1}]
  %14 = xla_tuple %s12, %s13
  %s15 = sld [smem:[#allocation0]]
  $region89: #{tpu_custom_call.1} parent=0
    _
  %s17 = ssub.s32 1, %s15
  %s18 = scalar_select 0, %s17, %s15
  $region1: #{tpu_custom_call.1} parent=0
    #allocation2 [shape = 'u8[2048]{0}', space=vmem, size = 0x800, scoped, tag = 'output window, operand 1']
    #allocation3 [shape = 's32[2]{0}', space=sflag, size = 0x8, scoped, tag = 'scoped memory for tpu_custom_call.1']
    %19 = vsyncpa [#allocation3], 0
    %s20 = scalar_lea.sflag [#allocation3], 1
    %21 = vsyncpa %s20, 0
    loop: start=0, step=1, limit=6
    $region2: #{tpu_custom_call.1} parent=1 // loop_pre_header
      _
    $region3: #{tpu_custom_call.1} parent=1 // loop_header
      %s23 = sphi 0, %s27
      %p24 = scmp.ge.s32.totalorder %s23, 6
      %s33 = sphi 0, %s35
      %s36 = sphi 0, %s33
      %s37 = sphi 0, %s36
      %s53 = sphi 0, %s37
      %s59 = sphi 0, %s61
      %s62 = sphi 0, %s59
      %s63 = sphi 0, %s62
      %s79 = sphi 0, %s63
      %s85 = sphi 0, %s87
      %s88 = sphi 0, %s85
      %s89 = sphi 0, %s88
      %s105 = sphi 0, %s89
      %s109 = sphi 0, %s109
      %s111 = sphi 0, %s109
      %s112 = sphi 0, %s111
      %s126 = sphi 0, %s112
      %s130 = sphi 0, %s130
      %s132 = sphi 0, %s130
      %s133 = sphi 0, %s132
      %s147 = sphi 0, %s133
      %s151 = sphi 0, %s151
      %s153 = sphi 0, %s151
      %s154 = sphi 0, %s153
      %s168 = sphi 0, %s154
      %s172 = sphi 0, %s172
      %s174 = sphi 0, %s172
      %s175 = sphi 0, %s174
      %s189 = sphi 0, %s175
      %s193 = sphi 0, %s193
      %s195 = sphi 0, %s193
      %s196 = sphi 0, %s195
      %s210 = sphi 0, %s196
      %s214 = sphi 0, %s214
      %s216 = sphi 0, %s214
      %s217 = sphi 0, %s216
      %s231 = sphi 0, %s217
      %s235 = sphi 0, %s235
      %s237 = sphi 0, %s235
      %s238 = sphi 0, %s237
      %s252 = sphi 0, %s238
      %s256 = sphi 0, %s256
      %s258 = sphi 0, %s256
      %s259 = sphi 0, %s258
      %s273 = sphi 0, %s259
      %s277 = sphi 0, %s277
      %s279 = sphi 0, %s277
      %s280 = sphi 0, %s279
      %s294 = sphi 0, %s280
      %s300 = sphi 0, %s302
      %s303 = sphi 0, %s300
      %s304 = sphi 0, %s303
      %s320 = sphi 0, %s304
      %s326 = sphi 0, %s328
      %s329 = sphi 0, %s326
      %s330 = sphi 0, %s329
      %s346 = sphi 0, %s330
    $region4: #{tpu_custom_call.1} parent=1 // loop_header_branch
      %26 = sbr.rel (%p24) target = $region8
    $region5: #{tpu_custom_call.1} parent=1 // loop_body
      %s28 = ssub.s32 %s23, 1
      %s29 = ssub.s32 %s23, 2
      %s30 = sadd.s32 %s23, 1
      %s31 = ssub.s32 %s23, %s30
      %p32 = scmp.eq.s32.totalorder %s31, 0
      %s34 = sadd.s32 %s33, 1
      %s35 = scalar_select %p32, %s33, %s34
      %p38 = pneg %p32
      %p39 = scmp.eq.s32.totalorder %s23, 3
      %p40 = por %p38, %p39
      %p41 = scmp.ne.s32.totalorder %s33, %s36
      %p42 = scmp.eq.s32.totalorder %s23, 0
      %p43 = por %p41, %p42
      %p44 = scmp.ne.s32.totalorder %s33, %s36
      %p45 = scmp.eq.s32.totalorder %s28, 3
      %p46 = por %p44, %p45
      %p47 = scmp.ne.s32.totalorder %s36, %s37
      %p48 = scmp.eq.s32.totalorder %s28, 0
      %p49 = por %p47, %p48
      %p50 = scmp.ne.s32.totalorder %s36, %s37
      %p51 = scmp.eq.s32.totalorder %s29, 3
      %p52 = por %p50, %p51
      %p54 = scmp.ne.s32.totalorder %s37, %s53
      %p55 = scmp.eq.s32.totalorder %s29, 0
      %p56 = por %p54, %p55
      %s57 = ssub.s32 %s23, %s30
      %p58 = scmp.eq.s32.totalorder %s57, 0
      %s60 = sadd.s32 %s59, 1
      %s61 = scalar_select %p58, %s59, %s60
      %p64 = pneg %p58
      %p65 = scmp.eq.s32.totalorder %s23, 3
      %p66 = por %p64, %p65
      %p67 = scmp.ne.s32.totalorder %s59, %s62
      %p68 = scmp.eq.s32.totalorder %s23, 0
      %p69 = por %p67, %p68
      %p70 = scmp.ne.s32.totalorder %s59, %s62
      %p71 = scmp.eq.s32.totalorder %s28, 3
      %p72 = por %p70, %p71
      %p73 = scmp.ne.s32.totalorder %s62, %s63
      %p74 = scmp.eq.s32.totalorder %s28, 0
      %p75 = por %p73, %p74
      %p76 = scmp.ne.s32.totalorder %s62, %s63
      %p77 = scmp.eq.s32.totalorder %s29, 3
      %p78 = por %p76, %p77
      %p80 = scmp.ne.s32.totalorder %s63, %s79
      %p81 = scmp.eq.s32.totalorder %s29, 0
      %p82 = por %p80, %p81
      %s83 = ssub.s32 %s23, %s30
      %p84 = scmp.eq.s32.totalorder %s83, 0
      %s86 = sadd.s32 %s85, 1
      %s87 = scalar_select %p84, %s85, %s86
      %p90 = pneg %p84
      %p91 = scmp.eq.s32.totalorder %s23, 3
      %p92 = por %p90, %p91
      %p93 = scmp.ne.s32.totalorder %s85, %s88
      %p94 = scmp.eq.s32.totalorder %s23, 0
      %p95 = por %p93, %p94
      %p96 = scmp.ne.s32.totalorder %s85, %s88
      %p97 = scmp.eq.s32.totalorder %s28, 3
      %p98 = por %p96, %p97
      %p99 = scmp.ne.s32.totalorder %s88, %s89
      %p100 = scmp.eq.s32.totalorder %s28, 0
      %p101 = por %p99, %p100
      %p102 = scmp.ne.s32.totalorder %s88, %s89
      %p103 = scmp.eq.s32.totalorder %s29, 3
      %p104 = por %p102, %p103
      %p106 = scmp.ne.s32.totalorder %s89, %s105
      %p107 = scmp.eq.s32.totalorder %s29, 0
      %p108 = por %p106, %p107
      %s110 = sadd.s32 %s109, 1
      %p113 = scmp.eq.s32.totalorder %s23, 3
      %p114 = scmp.ne.s32.totalorder %s109, %s111
      %p115 = scmp.eq.s32.totalorder %s23, 0
      %p116 = por %p114, %p115
      %p117 = scmp.ne.s32.totalorder %s109, %s111
      %p118 = scmp.eq.s32.totalorder %s28, 3
      %p119 = por %p117, %p118
      %p120 = scmp.ne.s32.totalorder %s111, %s112
      %p121 = scmp.eq.s32.totalorder %s28, 0
      %p122 = por %p120, %p121
      %p123 = scmp.ne.s32.totalorder %s111, %s112
      %p124 = scmp.eq.s32.totalorder %s29, 3
      %p125 = por %p123, %p124
      %p127 = scmp.ne.s32.totalorder %s112, %s126
      %p128 = scmp.eq.s32.totalorder %s29, 0
      %p129 = por %p127, %p128
      %s131 = sadd.s32 %s130, 1
      %p134 = scmp.eq.s32.totalorder %s23, 3
      %p135 = scmp.ne.s32.totalorder %s130, %s132
      %p136 = scmp.eq.s32.totalorder %s23, 0
      %p137 = por %p135, %p136
      %p138 = scmp.ne.s32.totalorder %s130, %s132
      %p139 = scmp.eq.s32.totalorder %s28, 3
      %p140 = por %p138, %p139
      %p141 = scmp.ne.s32.totalorder %s132, %s133
      %p142 = scmp.eq.s32.totalorder %s28, 0
      %p143 = por %p141, %p142
      %p144 = scmp.ne.s32.totalorder %s132, %s133
      %p145 = scmp.eq.s32.totalorder %s29, 3
      %p146 = por %p144, %p145
      %p148 = scmp.ne.s32.totalorder %s133, %s147
      %p149 = scmp.eq.s32.totalorder %s29, 0
      %p150 = por %p148, %p149
      %s152 = sadd.s32 %s151, 1
      %p155 = scmp.eq.s32.totalorder %s23, 3
      %p156 = scmp.ne.s32.totalorder %s151, %s153
      %p157 = scmp.eq.s32.totalorder %s23, 0
      %p158 = por %p156, %p157
      %p159 = scmp.ne.s32.totalorder %s151, %s153
      %p160 = scmp.eq.s32.totalorder %s28, 3
      %p161 = por %p159, %p160
      %p162 = scmp.ne.s32.totalorder %s153, %s154
      %p163 = scmp.eq.s32.totalorder %s28, 0
      %p164 = por %p162, %p163
      %p165 = scmp.ne.s32.totalorder %s153, %s154
      %p166 = scmp.eq.s32.totalorder %s29, 3
      %p167 = por %p165, %p166
      %p169 = scmp.ne.s32.totalorder %s154, %s168
      %p170 = scmp.eq.s32.totalorder %s29, 0
      %p171 = por %p169, %p170
      %s173 = sadd.s32 %s172, 1
      %p176 = scmp.eq.s32.totalorder %s23, 3
      %p177 = scmp.ne.s32.totalorder %s172, %s174
      %p178 = scmp.eq.s32.totalorder %s23, 0
      %p179 = por %p177, %p178
      %p180 = scmp.ne.s32.totalorder %s172, %s174
      %p181 = scmp.eq.s32.totalorder %s28, 3
      %p182 = por %p180, %p181
      %p183 = scmp.ne.s32.totalorder %s174, %s175
      %p184 = scmp.eq.s32.totalorder %s28, 0
      %p185 = por %p183, %p184
      %p186 = scmp.ne.s32.totalorder %s174, %s175
      %p187 = scmp.eq.s32.totalorder %s29, 3
      %p188 = por %p186, %p187
      %p190 = scmp.ne.s32.totalorder %s175, %s189
      %p191 = scmp.eq.s32.totalorder %s29, 0
      %p192 = por %p190, %p191
      %s194 = sadd.s32 %s193, 1
      %p197 = scmp.eq.s32.totalorder %s23, 3
      %p198 = scmp.ne.s32.totalorder %s193, %s195
      %p199 = scmp.eq.s32.totalorder %s23, 0
      %p200 = por %p198, %p199
      %p201 = scmp.ne.s32.totalorder %s193, %s195
      %p202 = scmp.eq.s32.totalorder %s28, 3
      %p203 = por %p201, %p202
      %p204 = scmp.ne.s32.totalorder %s195, %s196
      %p205 = scmp.eq.s32.totalorder %s28, 0
      %p206 = por %p204, %p205
      %p207 = scmp.ne.s32.totalorder %s195, %s196
      %p208 = scmp.eq.s32.totalorder %s29, 3
      %p209 = por %p207, %p208
      %p211 = scmp.ne.s32.totalorder %s196, %s210
      %p212 = scmp.eq.s32.totalorder %s29, 0
      %p213 = por %p211, %p212
      %s215 = sadd.s32 %s214, 1
      %p218 = scmp.eq.s32.totalorder %s23, 3
      %p219 = scmp.ne.s32.totalorder %s214, %s216
      %p220 = scmp.eq.s32.totalorder %s23, 0
      %p221 = por %p219, %p220
      %p222 = scmp.ne.s32.totalorder %s214, %s216
      %p223 = scmp.eq.s32.totalorder %s28, 3
      %p224 = por %p222, %p223
      %p225 = scmp.ne.s32.totalorder %s216, %s217
      %p226 = scmp.eq.s32.totalorder %s28, 0
      %p227 = por %p225, %p226
      %p228 = scmp.ne.s32.totalorder %s216, %s217
      %p229 = scmp.eq.s32.totalorder %s29, 3
      %p230 = por %p228, %p229
      %p232 = scmp.ne.s32.totalorder %s217, %s231
      %p233 = scmp.eq.s32.totalorder %s29, 0
      %p234 = por %p232, %p233
      %s236 = sadd.s32 %s235, 1
      %p239 = scmp.eq.s32.totalorder %s23, 3
      %p240 = scmp.ne.s32.totalorder %s235, %s237
      %p241 = scmp.eq.s32.totalorder %s23, 0
      %p242 = por %p240, %p241
      %p243 = scmp.ne.s32.totalorder %s235, %s237
      %p244 = scmp.eq.s32.totalorder %s28, 3
      %p245 = por %p243, %p244
      %p246 = scmp.ne.s32.totalorder %s237, %s238
      %p247 = scmp.eq.s32.totalorder %s28, 0
      %p248 = por %p246, %p247
      %p249 = scmp.ne.s32.totalorder %s237, %s238
      %p250 = scmp.eq.s32.totalorder %s29, 3
      %p251 = por %p249, %p250
      %p253 = scmp.ne.s32.totalorder %s238, %s252
      %p254 = scmp.eq.s32.totalorder %s29, 0
      %p255 = por %p253, %p254
      %s257 = sadd.s32 %s256, 1
      %p260 = scmp.eq.s32.totalorder %s23, 3
      %p261 = scmp.ne.s32.totalorder %s256, %s258
      %p262 = scmp.eq.s32.totalorder %s23, 0
      %p263 = por %p261, %p262
      %p264 = scmp.ne.s32.totalorder %s256, %s258
      %p265 = scmp.eq.s32.totalorder %s28, 3
      %p266 = por %p264, %p265
      %p267 = scmp.ne.s32.totalorder %s258, %s259
      %p268 = scmp.eq.s32.totalorder %s28, 0
      %p269 = por %p267, %p268
      %p270 = scmp.ne.s32.totalorder %s258, %s259
      %p271 = scmp.eq.s32.totalorder %s29, 3
      %p272 = por %p270, %p271
      %p274 = scmp.ne.s32.totalorder %s259, %s273
      %p275 = scmp.eq.s32.totalorder %s29, 0
      %p276 = por %p274, %p275
      %s278 = sadd.s32 %s277, 1
      %p281 = scmp.eq.s32.totalorder %s23, 3
      %p282 = scmp.ne.s32.totalorder %s277, %s279
      %p283 = scmp.eq.s32.totalorder %s23, 0
      %p284 = por %p282, %p283
      %p285 = scmp.ne.s32.totalorder %s277, %s279
      %p286 = scmp.eq.s32.totalorder %s28, 3
      %p287 = por %p285, %p286
      %p288 = scmp.ne.s32.totalorder %s279, %s280
      %p289 = scmp.eq.s32.totalorder %s28, 0
      %p290 = por %p288, %p289
      %p291 = scmp.ne.s32.totalorder %s279, %s280
      %p292 = scmp.eq.s32.totalorder %s29, 3
      %p293 = por %p291, %p292
      %p295 = scmp.ne.s32.totalorder %s280, %s294
      %p296 = scmp.eq.s32.totalorder %s29, 0
      %p297 = por %p295, %p296
      %s298 = ssub.s32 %s23, %s30
      %p299 = scmp.eq.s32.totalorder %s298, 0
      %s301 = sadd.s32 %s300, 1
      %s302 = scalar_select %p299, %s300, %s301
      %p305 = pneg %p299
      %p306 = scmp.eq.s32.totalorder %s23, 3
      %p307 = por %p305, %p306
      %p308 = scmp.ne.s32.totalorder %s300, %s303
      %p309 = scmp.eq.s32.totalorder %s23, 0
      %p310 = por %p308, %p309
      %p311 = scmp.ne.s32.totalorder %s300, %s303
      %p312 = scmp.eq.s32.totalorder %s28, 3
      %p313 = por %p311, %p312
      %p314 = scmp.ne.s32.totalorder %s303, %s304
      %p315 = scmp.eq.s32.totalorder %s28, 0
      %p316 = por %p314, %p315
      %p317 = scmp.ne.s32.totalorder %s303, %s304
      %p318 = scmp.eq.s32.totalorder %s29, 3
      %p319 = por %p317, %p318
      %p321 = scmp.ne.s32.totalorder %s304, %s320
      %p322 = scmp.eq.s32.totalorder %s29, 0
      %p323 = por %p321, %p322
      %s324 = ssub.s32 %s23, %s30
      %p325 = scmp.eq.s32.totalorder %s324, 0
      %s327 = sadd.s32 %s326, 1
      %s328 = scalar_select %p325, %s326, %s327
      %p331 = pneg %p325
      %p332 = scmp.eq.s32.totalorder %s23, 3
      %p333 = por %p331, %p332
      %p334 = scmp.ne.s32.totalorder %s326, %s329
      %p335 = scmp.eq.s32.totalorder %s23, 0
      %p336 = por %p334, %p335
      %p337 = scmp.ne.s32.totalorder %s326, %s329
      %p338 = scmp.eq.s32.totalorder %s28, 3
      %p339 = por %p337, %p338
      %p340 = scmp.ne.s32.totalorder %s329, %s330
      %p341 = scmp.eq.s32.totalorder %s28, 0
      %p342 = por %p340, %p341
      %p343 = scmp.ne.s32.totalorder %s329, %s330
      %p344 = scmp.eq.s32.totalorder %s29, 3
      %p345 = por %p343, %p344
      %p347 = scmp.ne.s32.totalorder %s330, %s346
      %p348 = scmp.eq.s32.totalorder %s29, 0
      %p349 = por %p347, %p348
      %p350 = scmp.le.s32.totalorder 1, %s23
      %p351 = scmp.lt.s32.totalorder %s23, 5
      %p352 = pnand %p350, %p351
      %p353 = pneg %p352
      // Predicated region
      $region9: #{tpu_custom_call.1} parent=5 // pred_check
        _
      $region10: #{tpu_custom_call.1} parent=5 // pred_check_branch
        %355 = sbr.rel (%p352) target = $region12
      $region11: #{tpu_custom_call.1} parent=5 // pred_region
        %s356 = ssub.s32 %s23, 1
        // Predicated region
        $region13: #{tpu_custom_call.1} parent=11 // pred_check
          %p357 = pneg %p122
        $region14: #{tpu_custom_call.1} parent=11 // pred_check_branch
          %359 = sbr.rel (%p357) target = $region16
        $region15: #{tpu_custom_call.1} parent=11 // pred_region
          _
        $region16: #{tpu_custom_call.1} parent=11 // pred_fallthru
          _
        // Predicated region
        $region17: #{tpu_custom_call.1} parent=11 // pred_check
          %p360 = pneg %p143
        $region18: #{tpu_custom_call.1} parent=11 // pred_check_branch
          %362 = sbr.rel (%p360) target = $region20
        $region19: #{tpu_custom_call.1} parent=11 // pred_region
          _
        $region20: #{tpu_custom_call.1} parent=11 // pred_fallthru
          _
        // Predicated region
        $region21: #{tpu_custom_call.1} parent=11 // pred_check
          %p363 = pneg %p164
        $region22: #{tpu_custom_call.1} parent=11 // pred_check_branch
          %365 = sbr.rel (%p363) target = $region24
        $region23: #{tpu_custom_call.1} parent=11 // pred_region
          _
        $region24: #{tpu_custom_call.1} parent=11 // pred_fallthru
          _
        // Predicated region
        $region25: #{tpu_custom_call.1} parent=11 // pred_check
          %p366 = pneg %p185
        $region26: #{tpu_custom_call.1} parent=11 // pred_check_branch
          %368 = sbr.rel (%p366) target = $region28
        $region27: #{tpu_custom_call.1} parent=11 // pred_region
          _
        $region28: #{tpu_custom_call.1} parent=11 // pred_fallthru
          _
        // Predicated region
        $region29: #{tpu_custom_call.1} parent=11 // pred_check
          %p369 = pneg %p206
        $region30: #{tpu_custom_call.1} parent=11 // pred_check_branch
          %371 = sbr.rel (%p369) target = $region32
        $region31: #{tpu_custom_call.1} parent=11 // pred_region
          _
        $region32: #{tpu_custom_call.1} parent=11 // pred_fallthru
          _
        // Predicated region
        $region33: #{tpu_custom_call.1} parent=11 // pred_check
          %p372 = pneg %p227
        $region34: #{tpu_custom_call.1} parent=11 // pred_check_branch
          %374 = sbr.rel (%p372) target = $region36
        $region35: #{tpu_custom_call.1} parent=11 // pred_region
          _
        $region36: #{tpu_custom_call.1} parent=11 // pred_fallthru
          _
        // Predicated region
        $region37: #{tpu_custom_call.1} parent=11 // pred_check
          %p375 = pneg %p248
        $region38: #{tpu_custom_call.1} parent=11 // pred_check_branch
          %377 = sbr.rel (%p375) target = $region40
        $region39: #{tpu_custom_call.1} parent=11 // pred_region
          _
        $region40: #{tpu_custom_call.1} parent=11 // pred_fallthru
          _
        // Predicated region
        $region41: #{tpu_custom_call.1} parent=11 // pred_check
          %p378 = pneg %p269
        $region42: #{tpu_custom_call.1} parent=11 // pred_check_branch
          %380 = sbr.rel (%p378) target = $region44
        $region43: #{tpu_custom_call.1} parent=11 // pred_region
          _
        $region44: #{tpu_custom_call.1} parent=11 // pred_fallthru
          _
        // Predicated region
        $region45: #{tpu_custom_call.1} parent=11 // pred_check
          %p381 = pneg %p290
        $region46: #{tpu_custom_call.1} parent=11 // pred_check_branch
          %383 = sbr.rel (%p381) target = $region48
        $region47: #{tpu_custom_call.1} parent=11 // pred_region
          _
        $region48: #{tpu_custom_call.1} parent=11 // pred_fallthru
          _
      $region12: #{tpu_custom_call.1} parent=5 // pred_fallthru
        _
      %p384 = scmp.lt.s32.totalorder %s23, 4
      // Predicated region
      $region49: #{tpu_custom_call.1} parent=5 // pred_check
        %p385 = pneg %p384
      $region50: #{tpu_custom_call.1} parent=5 // pred_check_branch
        %387 = sbr.rel (%p385) target = $region52
      $region51: #{tpu_custom_call.1} parent=5 // pred_region
        // Predicated region
        $region53: #{tpu_custom_call.1} parent=51 // pred_check
          %p388 = pneg %p43
        $region54: #{tpu_custom_call.1} parent=51 // pred_check_branch
          %390 = sbr.rel (%p388) target = $region56
        $region55: #{tpu_custom_call.1} parent=51 // pred_region
          %p391 = scmp.lt.s32.totalorder %s23, 3
          %s392 = scalar_select %p391, %s23, 3
          %s393 = smul.addr %s392, 4
          %s394 = scalar_lea.vmem %s0, %s393
        $region56: #{tpu_custom_call.1} parent=51 // pred_fallthru
          _
        // Predicated region
        $region57: #{tpu_custom_call.1} parent=51 // pred_check
          %p395 = pneg %p69
        $region58: #{tpu_custom_call.1} parent=51 // pred_check_branch
          %397 = sbr.rel (%p395) target = $region60
        $region59: #{tpu_custom_call.1} parent=51 // pred_region
          %p398 = scmp.lt.s32.totalorder %s23, 3
          %s399 = scalar_select %p398, %s23, 3
          %s400 = smul.addr %s399, 4
          %s401 = scalar_lea.vmem %s1, %s400
        $region60: #{tpu_custom_call.1} parent=51 // pred_fallthru
          _
        // Predicated region
        $region61: #{tpu_custom_call.1} parent=51 // pred_check
          %p402 = pneg %p95
        $region62: #{tpu_custom_call.1} parent=51 // pred_check_branch
          %404 = sbr.rel (%p402) target = $region64
        $region63: #{tpu_custom_call.1} parent=51 // pred_region
          %p405 = scmp.lt.s32.totalorder %s23, 3
          %s406 = scalar_select %p405, %s23, 3
          %s407 = smul.addr %s406, 4
          %s408 = smul.addr %s407, 8
          %s409 = scalar_lea.vmem %s2, %s408
        $region64: #{tpu_custom_call.1} parent=51 // pred_fallthru
          _
      $region52: #{tpu_custom_call.1} parent=5 // pred_fallthru
        _
      %p410 = scmp.le.s32.totalorder 1, %s23
      %p411 = scmp.lt.s32.totalorder %s23, 5
      %p412 = pnand %p410, %p411
      %p413 = pneg %p412
      // Predicated region
      $region65: #{tpu_custom_call.1} parent=5 // pred_check
        _
      $region66: #{tpu_custom_call.1} parent=5 // pred_check_branch
        %415 = sbr.rel (%p412) target = $region68
      $region67: #{tpu_custom_call.1} parent=5 // pred_region
        %s416 = ssub.s32 %s23, 1
        %p417 = scmp.lt.s32.totalorder %s28, 3
        %s418 = scalar_select %p417, %s28, 3
        %s419 = smul.addr %s418, 4
        %s420 = scalar_lea.vmem %s0, %s419
        %p421 = pneg %p49
        %p422 = pneg %p46
        %p423 = scmp.lt.s32.totalorder %s28, 3
        %s424 = scalar_select %p423, %s28, 3
        %s425 = smul.addr %s424, 4
        %s426 = scalar_lea.vmem %s1, %s425
        %p427 = pneg %p75
        %p428 = pneg %p72
        %p429 = scmp.lt.s32.totalorder %s28, 3
        %s430 = scalar_select %p429, %s28, 3
        %s431 = smul.addr %s430, 4
        %s432 = smul.addr %s431, 8
        %s433 = scalar_lea.vmem %s2, %s432
        %p434 = pneg %p101
        %p435 = pneg %p98
        %p436 = pneg %p122
        %p437 = pneg %p119
        %p438 = pneg %p143
        %p439 = pneg %p140
        %p440 = pneg %p164
        %p441 = pneg %p161
        %p442 = pneg %p185
        %p443 = pneg %p182
        %p444 = pneg %p206
        %p445 = pneg %p203
        %p446 = pneg %p227
        %p447 = pneg %p224
        %p448 = pneg %p248
        %p449 = pneg %p245
        %p450 = pneg %p269
        %p451 = pneg %p266
        %p452 = pneg %p290
        %p453 = pneg %p287
        %p454 = pneg %p316
        %p455 = pneg %p313
        %p456 = scmp.lt.s32.totalorder %s28, 3
        %s457 = scalar_select %p456, %s28, 3
        %s458 = smul.addr %s457, 8
        %s459 = smul.addr %s458, 8
        %s460 = scalar_lea.vmem %s12, %s459
        %p461 = pneg %p342
        %p462 = pneg %p339
        %s463 = sand.u32 %s329, 1
        %s464 = scalar_lea.sflag [#allocation3], %s463
        %s465 = sand.u32 %s329, 1
        %s466 = smul.addr %s465, 2
        %s467 = scalar_lea.vmem [#allocation2], %s466
        %p468 = scmp.lt.s32.totalorder %s28, 3
        %s469 = scalar_select %p468, %s28, 3
        %s470 = smul.addr %s469, 4
        %s471 = scalar_lea.vmem %s0, %s470
        %p472 = scmp.lt.s32.totalorder %s28, 3
        %s473 = scalar_select %p472, %s28, 3
        %s474 = smul.addr %s473, 4
        %s475 = scalar_lea.vmem %s1, %s474
        %p476 = scmp.lt.s32.totalorder %s28, 3
        %s477 = scalar_select %p476, %s28, 3
        %s478 = smul.addr %s477, 4
        %s479 = smul.addr %s478, 8
        %s480 = scalar_lea.vmem %s2, %s479
        %p481 = scmp.lt.s32.totalorder %s28, 3
        %s482 = scalar_select %p481, %s28, 3
        %s483 = smul.addr %s482, 8
        %s484 = smul.addr %s483, 8
        %s485 = scalar_lea.vmem %s12, %s484
        %v486 = vld [vmem:[%s471] sm:$0xf]
        %v487 = vld [vmem:[%s3] sm:$0xff]
        %v488 = vld [vmem:[%s3 + $0x8] sm:$0xff]
        %v489 = vld [vmem:[%s3 + $0x10] sm:$0xff]
        %v490 = vld [vmem:[%s3 + $0x18] sm:$0xff]
        %vm491 = vcmask 31744
        %v493 = vsel %vm491, %v487, 0
        %v496 = vsel %vm491, %v488, 0
        %v499 = vsel %vm491, %v489, 0
        %v502 = vsel %vm491, %v490, 0
        %vm504 = vcmask 1043456
        %v506 = vsel %vm504, %v486, 0
        %508 = vmatprep.subr.mxu0 0.0
        %509 = vmatpush1.msra.mxu0 %v506
        %510 = vmatprep.subr.mxu0 0.0
        %511 = vmatpush1.msra.mxu0 0.0
        %512 = vmatprep.subr.mxu0 0.0
        %513 = vmatpush1.msra.mxu0 0.0
        %514 = vmatprep.subr.mxu0 0.0
        %515 = vmatpush1.msra.mxu0 0.0
        %516 = vmatprep.subr.mxu0 0.0
        %517 = vmatpush1.msra.mxu0 0.0
        %518 = vmatprep.subr.mxu0 0.0
        %519 = vmatpush1.msra.mxu0 0.0
        %520 = vmatprep.subr.mxu0 0.0
        %521 = vmatpush1.msra.mxu0 0.0
        %522 = vmatprep.subr.mxu0 0.0
        %523 = vmatpush1.msra.mxu0 0.0
        %524 = vmatprep.subr.mxu0 0.0
        %525 = vmatpush1.msra.mxu0 0.0
        %526 = vmatprep.subr.mxu0 0.0
        %527 = vmatpush1.msra.mxu0 0.0
        %528 = vmatprep.subr.mxu0 0.0
        %529 = vmatpush1.msra.mxu0 0.0
        %530 = vmatprep.subr.mxu0 0.0
        %531 = vmatpush1.msra.mxu0 0.0
        %532 = vmatprep.subr.mxu0 0.0
        %533 = vmatpush1.msra.mxu0 0.0
        %534 = vmatprep.subr.mxu0 0.0
        %535 = vmatpush1.msra.mxu0 0.0
        %536 = vmatprep.subr.mxu0 0.0
        %537 = vmatpush1.msra.mxu0 0.0
        %538 = vmatprep.subr.mxu0 0.0
        %539 = vmatpush1.msra.mxu0 0.0
        %540 = vmatprep.subr.mxu0 0.0
        %541 = vmatpush1.msra.mxu0 0.0
        %542 = vmatprep.subr.mxu0 0.0
        %543 = vmatpush1.msra.mxu0 0.0
        %544 = vmatprep.subr.mxu0 0.0
        %545 = vmatpush1.msra.mxu0 0.0
        %546 = vmatprep.subr.mxu0 0.0
        %547 = vmatpush1.msra.mxu0 0.0
        %548 = vmatprep.subr.mxu0 0.0
        %549 = vmatpush1.msra.mxu0 0.0
        %550 = vmatprep.subr.mxu0 0.0
        %551 = vmatpush1.msra.mxu0 0.0
        %552 = vmatprep.subr.mxu0 0.0
        %553 = vmatpush1.msra.mxu0 0.0
        %554 = vmatprep.subr.mxu0 0.0
        %555 = vmatpush1.msra.mxu0 0.0
        %556 = vmatprep.subr.mxu0 0.0
        %557 = vmatpush1.msra.mxu0 0.0
        %558 = vmatprep.subr.mxu0 0.0
        %559 = vmatpush1.msra.mxu0 0.0
        %560 = vmatprep.subr.mxu0 0.0
        %561 = vmatpush1.msra.mxu0 0.0
        %562 = vmatprep.subr.mxu0 0.0
        %563 = vmatpush1.msra.mxu0 0.0
        %564 = vmatprep.subr.mxu0 0.0
        %565 = vmatpush1.msra.mxu0 0.0
        %566 = vmatprep.subr.mxu0 0.0
        %567 = vmatpush1.msra.mxu0 0.0
        %568 = vmatprep.subr.mxu0 0.0
        %569 = vmatpush1.msra.mxu0 0.0
        %570 = vmatprep.subr.mxu0 0.0
        %571 = vmatpush1.msra.mxu0 0.0
        %572 = vmatprep.mubr.f32.mxu0 0.0
        %573 = vmatmul.mubr.f32.gmra.mrb[0].mxu0 %v493
        %v574 = vpop.f32.mrb[0].mxu0
        %v575 = vadd.f32 0.0, %v574
        %v576 = vpop.f32.mrb[0].mxu0
        %577 = vmatprep.mubr.f32.mxu0 0.0
        %578 = vmatmul.mubr.f32.gmra.mrb[0].mxu0 %v496
        %v579 = vpop.f32.mrb[0].mxu0
        %v580 = vadd.f32 0.0, %v579
        %v581 = vpop.f32.mrb[0].mxu0
        %582 = vmatprep.mubr.f32.mxu0 0.0
        %583 = vmatmul.mubr.f32.gmra.mrb[0].mxu0 %v499
        %v584 = vpop.f32.mrb[0].mxu0
        %v585 = vadd.f32 0.0, %v584
        %v586 = vpop.f32.mrb[0].mxu0
        %587 = vmatprep.mubr.f32.mxu0 0.0
        %588 = vmatmul.mubr.f32.gmra.mrb[0].mxu0 %v502
        %v589 = vpop.f32.mrb[0].mxu0
        %v590 = vadd.f32 0.0, %v589
        %v591 = vpop.f32.mrb[0].mxu0
        %592 = vdwg.mxu0
        %v593 = vmax.f32 %v575, 0.0
        %v594 = vmax.f32 %v580, 0.0
        %v595 = vmax.f32 %v585, 0.0
        %v596 = vmax.f32 %v590, 0.0
        %v597 = vld [vmem:[%s4] sm:$0xff]
        %v598 = vld [vmem:[%s4 + $0x8] sm:$0xff]
        %v599 = vld [vmem:[%s4 + $0x10] sm:$0xff]
        %v600 = vld [vmem:[%s4 + $0x18] sm:$0xff]
        %602 = vset.pattern.permute.xlu0 32
        %603 = vperm.xlu0 %602, %v597
        %v604 = vpop.permute.xlu0 %603
        %607 = vset.pattern.permute.xlu0 32
        %608 = vperm.xlu0 %607, %v598
        %v609 = vpop.permute.xlu0 %608
        %612 = vset.pattern.permute.xlu0 32
        %613 = vperm.xlu0 %612, %v599
        %v614 = vpop.permute.xlu0 %613
        %617 = vset.pattern.permute.xlu0 32
        %618 = vperm.xlu0 %617, %v600
        %v619 = vpop.permute.xlu0 %618
        %vm621 = vcmask 261120
        %v622 = vsel %vm621, %v597, 0
        %v624 = vsel %vm621, %v598, 0
        %v626 = vsel %vm621, %v599, 0
        %v628 = vsel %vm621, %v600, 0
        %630 = vmatprep.subr.mxu0 0.0
        %631 = vmatpush1.msra.mxu0 %v593
        %632 = vmatprep.subr.mxu0 0.0
        %633 = vmatpush1.msra.mxu0 %v594
        %634 = vmatprep.subr.mxu0 0.0
        %635 = vmatpush1.msra.mxu0 %v595
        %636 = vmatprep.subr.mxu0 0.0
        %637 = vmatpush1.msra.mxu0 %v596
        %638 = vmatprep.subr.mxu0 0.0
        %639 = vmatpush1.msra.mxu0 0.0
        %640 = vmatprep.subr.mxu0 0.0
        %641 = vmatpush1.msra.mxu0 0.0
        %642 = vmatprep.subr.mxu0 0.0
        %643 = vmatpush1.msra.mxu0 0.0
        %644 = vmatprep.subr.mxu0 0.0
        %645 = vmatpush1.msra.mxu0 0.0
        %646 = vmatprep.subr.mxu0 0.0
        %647 = vmatpush1.msra.mxu0 0.0
        %648 = vmatprep.subr.mxu0 0.0
        %649 = vmatpush1.msra.mxu0 0.0
        %650 = vmatprep.subr.mxu0 0.0
        %651 = vmatpush1.msra.mxu0 0.0
        %652 = vmatprep.subr.mxu0 0.0
        %653 = vmatpush1.msra.mxu0 0.0
        %654 = vmatprep.subr.mxu0 0.0
        %655 = vmatpush1.msra.mxu0 0.0
        %656 = vmatprep.subr.mxu0 0.0
        %657 = vmatpush1.msra.mxu0 0.0
        %658 = vmatprep.subr.mxu0 0.0
        %659 = vmatpush1.msra.mxu0 0.0
        %660 = vmatprep.subr.mxu0 0.0
        %661 = vmatpush1.msra.mxu0 0.0
        %662 = vmatprep.subr.mxu0 0.0
        %663 = vmatpush1.msra.mxu0 0.0
        %664 = vmatprep.subr.mxu0 0.0
        %665 = vmatpush1.msra.mxu0 0.0
        %666 = vmatprep.subr.mxu0 0.0
        %667 = vmatpush1.msra.mxu0 0.0
        %668 = vmatprep.subr.mxu0 0.0
        %669 = vmatpush1.msra.mxu0 0.0
        %670 = vmatprep.subr.mxu0 0.0
        %671 = vmatpush1.msra.mxu0 0.0
        %672 = vmatprep.subr.mxu0 0.0
        %673 = vmatpush1.msra.mxu0 0.0
        %674 = vmatprep.subr.mxu0 0.0
        %675 = vmatpush1.msra.mxu0 0.0
        %676 = vmatprep.subr.mxu0 0.0
        %677 = vmatpush1.msra.mxu0 0.0
        %678 = vmatprep.subr.mxu0 0.0
        %679 = vmatpush1.msra.mxu0 0.0
        %680 = vmatprep.subr.mxu0 0.0
        %681 = vmatpush1.msra.mxu0 0.0
        %682 = vmatprep.subr.mxu0 0.0
        %683 = vmatpush1.msra.mxu0 0.0
        %684 = vmatprep.subr.mxu0 0.0
        %685 = vmatpush1.msra.mxu0 0.0
        %686 = vmatprep.subr.mxu0 0.0
        %687 = vmatpush1.msra.mxu0 0.0
        %688 = vmatprep.subr.mxu0 0.0
        %689 = vmatpush1.msra.mxu0 0.0
        %690 = vmatprep.subr.mxu0 0.0
        %691 = vmatpush1.msra.mxu0 0.0
        %692 = vmatprep.subr.mxu0 0.0
        %693 = vmatpush1.msra.mxu0 0.0
        %694 = vmatprep.mubr.f32.mxu0 0.0
        %695 = vmatmul.mubr.f32.gmra.mrb[0].mxu0 %v622
        %v696 = vpop.f32.mrb[0].mxu0
        %v697 = vadd.f32 %v604, %v696
        %v698 = vpop.f32.mrb[0].mxu0
        %699 = vmatprep.mubr.f32.mxu0 0.0
        %700 = vmatmul.mubr.f32.gmra.mrb[0].mxu0 %v624
        %v701 = vpop.f32.mrb[0].mxu0
        %v702 = vadd.f32 %v609, %v701
        %v703 = vpop.f32.mrb[0].mxu0
        %704 = vmatprep.mubr.f32.mxu0 0.0
        %705 = vmatmul.mubr.f32.gmra.mrb[0].mxu0 %v626
        %v706 = vpop.f32.mrb[0].mxu0
        %v707 = vadd.f32 %v614, %v706
        %v708 = vpop.f32.mrb[0].mxu0
        %709 = vmatprep.mubr.f32.mxu0 0.0
        %710 = vmatmul.mubr.f32.gmra.mrb[0].mxu0 %v628
        %v711 = vpop.f32.mrb[0].mxu0
        %v712 = vadd.f32 %v619, %v711
        %v713 = vpop.f32.mrb[0].mxu0
        %714 = vdwg.mxu0
        %v715 = vmax.f32 %v697, 0.0
        %v716 = vmax.f32 %v702, 0.0
        %v717 = vmax.f32 %v707, 0.0
        %v718 = vmax.f32 %v712, 0.0
        %v719 = vld [vmem:[%s5] sm:$0xff]
        %v720 = vld [vmem:[%s5 + $0x8] sm:$0xff]
        %v721 = vld [vmem:[%s5 + $0x10] sm:$0xff]
        %v722 = vld [vmem:[%s5 + $0x18] sm:$0xff]
        %724 = vset.pattern.permute.xlu0 32
        %725 = vperm.xlu0 %724, %v719
        %v726 = vpop.permute.xlu0 %725
        %729 = vset.pattern.permute.xlu0 32
        %730 = vperm.xlu0 %729, %v720
        %v731 = vpop.permute.xlu0 %730
        %734 = vset.pattern.permute.xlu0 32
        %735 = vperm.xlu0 %734, %v721
        %v736 = vpop.permute.xlu0 %735
        %739 = vset.pattern.permute.xlu0 32
        %740 = vperm.xlu0 %739, %v722
        %v741 = vpop.permute.xlu0 %740
        %v743 = vsel %vm621, %v719, 0
        %v745 = vsel %vm621, %v720, 0
        %v747 = vsel %vm621, %v721, 0
        %v749 = vsel %vm621, %v722, 0
        %751 = vmatprep.subr.mxu0 0.0
        %752 = vmatpush1.msra.mxu0 %v715
        %753 = vmatprep.subr.mxu0 0.0
        %754 = vmatpush1.msra.mxu0 %v716
        %755 = vmatprep.subr.mxu0 0.0
        %756 = vmatpush1.msra.mxu0 %v717
        %757 = vmatprep.subr.mxu0 0.0
        %758 = vmatpush1.msra.mxu0 %v718
        %759 = vmatprep.subr.mxu0 0.0
        %760 = vmatpush1.msra.mxu0 0.0
        %761 = vmatprep.subr.mxu0 0.0
        %762 = vmatpush1.msra.mxu0 0.0
        %763 = vmatprep.subr.mxu0 0.0
        %764 = vmatpush1.msra.mxu0 0.0
        %765 = vmatprep.subr.mxu0 0.0
        %766 = vmatpush1.msra.mxu0 0.0
        %767 = vmatprep.subr.mxu0 0.0
        %768 = vmatpush1.msra.mxu0 0.0
        %769 = vmatprep.subr.mxu0 0.0
        %770 = vmatpush1.msra.mxu0 0.0
        %771 = vmatprep.subr.mxu0 0.0
        %772 = vmatpush1.msra.mxu0 0.0
        %773 = vmatprep.subr.mxu0 0.0
        %774 = vmatpush1.msra.mxu0 0.0
        %775 = vmatprep.subr.mxu0 0.0
        %776 = vmatpush1.msra.mxu0 0.0
        %777 = vmatprep.subr.mxu0 0.0
        %778 = vmatpush1.msra.mxu0 0.0
        %779 = vmatprep.subr.mxu0 0.0
        %780 = vmatpush1.msra.mxu0 0.0
        %781 = vmatprep.subr.mxu0 0.0
        %782 = vmatpush1.msra.mxu0 0.0
        %783 = vmatprep.subr.mxu0 0.0
        %784 = vmatpush1.msra.mxu0 0.0
        %785 = vmatprep.subr.mxu0 0.0
        %786 = vmatpush1.msra.mxu0 0.0
        %787 = vmatprep.subr.mxu0 0.0
        %788 = vmatpush1.msra.mxu0 0.0
        %789 = vmatprep.subr.mxu0 0.0
        %790 = vmatpush1.msra.mxu0 0.0
        %791 = vmatprep.subr.mxu0 0.0
        %792 = vmatpush1.msra.mxu0 0.0
        %793 = vmatprep.subr.mxu0 0.0
        %794 = vmatpush1.msra.mxu0 0.0
        %795 = vmatprep.subr.mxu0 0.0
        %796 = vmatpush1.msra.mxu0 0.0
        %797 = vmatprep.subr.mxu0 0.0
        %798 = vmatpush1.msra.mxu0 0.0
        %799 = vmatprep.subr.mxu0 0.0
        %800 = vmatpush1.msra.mxu0 0.0
        %801 = vmatprep.subr.mxu0 0.0
        %802 = vmatpush1.msra.mxu0 0.0
        %803 = vmatprep.subr.mxu0 0.0
        %804 = vmatpush1.msra.mxu0 0.0
        %805 = vmatprep.subr.mxu0 0.0
        %806 = vmatpush1.msra.mxu0 0.0
        %807 = vmatprep.subr.mxu0 0.0
        %808 = vmatpush1.msra.mxu0 0.0
        %809 = vmatprep.subr.mxu0 0.0
        %810 = vmatpush1.msra.mxu0 0.0
        %811 = vmatprep.subr.mxu0 0.0
        %812 = vmatpush1.msra.mxu0 0.0
        %813 = vmatprep.subr.mxu0 0.0
        %814 = vmatpush1.msra.mxu0 0.0
        %815 = vmatprep.mubr.f32.mxu0 0.0
        %816 = vmatmul.mubr.f32.gmra.mrb[0].mxu0 %v743
        %v817 = vpop.f32.mrb[0].mxu0
        %v818 = vadd.f32 %v726, %v817
        %v819 = vpop.f32.mrb[0].mxu0
        %820 = vmatprep.mubr.f32.mxu0 0.0
        %821 = vmatmul.mubr.f32.gmra.mrb[0].mxu0 %v745
        %v822 = vpop.f32.mrb[0].mxu0
        %v823 = vadd.f32 %v731, %v822
        %v824 = vpop.f32.mrb[0].mxu0
        %825 = vmatprep.mubr.f32.mxu0 0.0
        %826 = vmatmul.mubr.f32.gmra.mrb[0].mxu0 %v747
        %v827 = vpop.f32.mrb[0].mxu0
        %v828 = vadd.f32 %v736, %v827
        %v829 = vpop.f32.mrb[0].mxu0
        %830 = vmatprep.mubr.f32.mxu0 0.0
        %831 = vmatmul.mubr.f32.gmra.mrb[0].mxu0 %v749
        %v832 = vpop.f32.mrb[0].mxu0
        %v833 = vadd.f32 %v741, %v832
        %v834 = vpop.f32.mrb[0].mxu0
        %835 = vdwg.mxu0
        %vm836 = vcmask 130048
        %v837 = vsel %vm836, %v818, 0.0
        %838 = vadd.xlane.f32.xlu0 %v837
        %v839 = vpop.xlane.xlu0 %838
        %v840 = vsel %vm836, %v823, 0.0
        %841 = vadd.xlane.f32.xlu0 %v840
        %v842 = vpop.xlane.xlu0 %841
        %v843 = vsel %vm836, %v828, 0.0
        %844 = vadd.xlane.f32.xlu0 %v843
        %v845 = vpop.xlane.xlu0 %844
        %v846 = vsel %vm836, %v833, 0.0
        %847 = vadd.xlane.f32.xlu0 %v846
        %v848 = vpop.xlane.xlu0 %847
        %v849 = vrcp.pop 16.0
        %v850 = vmul.f32 %v839, %v849
        %v851 = vmul.f32 %v842, %v849
        %v852 = vmul.f32 %v845, %v849
        %v853 = vmul.f32 %v848, %v849
        %v854 = vld [vmem:[%s6] sm:$0xff]
        %v855 = vld [vmem:[%s6 + $0x8] sm:$0xff]
        %v856 = vld [vmem:[%s6 + $0x10] sm:$0xff]
        %v857 = vld [vmem:[%s6 + $0x18] sm:$0xff]
        %862 = vrot.lane.b32.xlu0 %v854, 96
        %v863 = vpop.permute.xlu0 %862
        %864 = vrot.lane.b32.xlu0 %v855, 96
        %v865 = vpop.permute.xlu0 %864
        %866 = vrot.lane.b32.xlu0 %v856, 96
        %v867 = vpop.permute.xlu0 %866
        %868 = vrot.lane.b32.xlu0 %v857, 96
        %v869 = vpop.permute.xlu0 %868
        %v874 = vsel %vm621, %v854, 0
        %v876 = vsel %vm621, %v855, 0
        %v878 = vsel %vm621, %v856, 0
        %v880 = vsel %vm621, %v857, 0
        %882 = vmatprep.subr.mxu0 0.0
        %883 = vmatpush1.msra.mxu0 %v850
        %884 = vmatprep.subr.mxu0 0.0
        %885 = vmatpush1.msra.mxu0 %v851
        %886 = vmatprep.subr.mxu0 0.0
        %887 = vmatpush1.msra.mxu0 %v852
        %888 = vmatprep.subr.mxu0 0.0
        %889 = vmatpush1.msra.mxu0 %v853
        %890 = vmatprep.subr.mxu0 0.0
        %891 = vmatpush1.msra.mxu0 0.0
        %892 = vmatprep.subr.mxu0 0.0
        %893 = vmatpush1.msra.mxu0 0.0
        %894 = vmatprep.subr.mxu0 0.0
        %895 = vmatpush1.msra.mxu0 0.0
        %896 = vmatprep.subr.mxu0 0.0
        %897 = vmatpush1.msra.mxu0 0.0
        %898 = vmatprep.subr.mxu0 0.0
        %899 = vmatpush1.msra.mxu0 0.0
        %900 = vmatprep.subr.mxu0 0.0
        %901 = vmatpush1.msra.mxu0 0.0
        %902 = vmatprep.subr.mxu0 0.0
        %903 = vmatpush1.msra.mxu0 0.0
        %904 = vmatprep.subr.mxu0 0.0
        %905 = vmatpush1.msra.mxu0 0.0
        %906 = vmatprep.subr.mxu0 0.0
        %907 = vmatpush1.msra.mxu0 0.0
        %908 = vmatprep.subr.mxu0 0.0
        %909 = vmatpush1.msra.mxu0 0.0
        %910 = vmatprep.subr.mxu0 0.0
        %911 = vmatpush1.msra.mxu0 0.0
        %912 = vmatprep.subr.mxu0 0.0
        %913 = vmatpush1.msra.mxu0 0.0
        %914 = vmatprep.subr.mxu0 0.0
        %915 = vmatpush1.msra.mxu0 0.0
        %916 = vmatprep.subr.mxu0 0.0
        %917 = vmatpush1.msra.mxu0 0.0
        %918 = vmatprep.subr.mxu0 0.0
        %919 = vmatpush1.msra.mxu0 0.0
        %920 = vmatprep.subr.mxu0 0.0
        %921 = vmatpush1.msra.mxu0 0.0
        %922 = vmatprep.subr.mxu0 0.0
        %923 = vmatpush1.msra.mxu0 0.0
        %924 = vmatprep.subr.mxu0 0.0
        %925 = vmatpush1.msra.mxu0 0.0
        %926 = vmatprep.subr.mxu0 0.0
        %927 = vmatpush1.msra.mxu0 0.0
        %928 = vmatprep.subr.mxu0 0.0
        %929 = vmatpush1.msra.mxu0 0.0
        %930 = vmatprep.subr.mxu0 0.0
        %931 = vmatpush1.msra.mxu0 0.0
        %932 = vmatprep.subr.mxu0 0.0
        %933 = vmatpush1.msra.mxu0 0.0
        %934 = vmatprep.subr.mxu0 0.0
        %935 = vmatpush1.msra.mxu0 0.0
        %936 = vmatprep.subr.mxu0 0.0
        %937 = vmatpush1.msra.mxu0 0.0
        %938 = vmatprep.subr.mxu0 0.0
        %939 = vmatpush1.msra.mxu0 0.0
        %940 = vmatprep.subr.mxu0 0.0
        %941 = vmatpush1.msra.mxu0 0.0
        %942 = vmatprep.subr.mxu0 0.0
        %943 = vmatpush1.msra.mxu0 0.0
        %944 = vmatprep.subr.mxu0 0.0
        %945 = vmatpush1.msra.mxu0 0.0
        %946 = vmatprep.mubr.f32.mxu0 0.0
        %947 = vmatmul.mubr.f32.gmra.mrb[0].mxu0 %v874
        %v948 = vpop.f32.mrb[0].mxu0
        %v949 = vadd.f32 %v863, %v948
        %v950 = vpop.f32.mrb[0].mxu0
        %951 = vmatprep.mubr.f32.mxu0 0.0
        %952 = vmatmul.mubr.f32.gmra.mrb[0].mxu0 %v876
        %v953 = vpop.f32.mrb[0].mxu0
        %v954 = vadd.f32 %v865, %v953
        %v955 = vpop.f32.mrb[0].mxu0
        %956 = vmatprep.mubr.f32.mxu0 0.0
        %957 = vmatmul.mubr.f32.gmra.mrb[0].mxu0 %v878
        %v958 = vpop.f32.mrb[0].mxu0
        %v959 = vadd.f32 %v867, %v958
        %v960 = vpop.f32.mrb[0].mxu0
        %961 = vmatprep.mubr.f32.mxu0 0.0
        %962 = vmatmul.mubr.f32.gmra.mrb[0].mxu0 %v880
        %v963 = vpop.f32.mrb[0].mxu0
        %v964 = vadd.f32 %v869, %v963
        %v965 = vpop.f32.mrb[0].mxu0
        %966 = vdwg.mxu0
        %v967 = vmax.f32 %v949, 0.0
        %v968 = vmax.f32 %v954, 0.0
        %v969 = vmax.f32 %v959, 0.0
        %v970 = vmax.f32 %v964, 0.0
        %v971 = vld [vmem:[%s7] sm:$0xff]
        %v972 = vld [vmem:[%s7 + $0x8] sm:$0xff]
        %v973 = vld [vmem:[%s7 + $0x10] sm:$0xff]
        %v974 = vld [vmem:[%s7 + $0x18] sm:$0xff]
        %v975 = vld [vmem:[%s7 + $0x20] sm:$0xff]
        %v976 = vld [vmem:[%s7 + $0x28] sm:$0xff]
        %v977 = vld [vmem:[%s7 + $0x30] sm:$0xff]
        %v978 = vld [vmem:[%s7 + $0x38] sm:$0xff]
        %987 = vrot.lane.b32.xlu0 %v971, 96
        %v988 = vpop.permute.xlu0 %987
        %989 = vrot.lane.b32.xlu0 %v972, 96
        %v990 = vpop.permute.xlu0 %989
        %991 = vrot.lane.b32.xlu0 %v973, 96
        %v992 = vpop.permute.xlu0 %991
        %993 = vrot.lane.b32.xlu0 %v974, 96
        %v994 = vpop.permute.xlu0 %993
        %995 = vrot.lane.b32.xlu0 %v975, 96
        %v996 = vpop.permute.xlu0 %995
        %997 = vrot.lane.b32.xlu0 %v976, 96
        %v998 = vpop.permute.xlu0 %997
        %999 = vrot.lane.b32.xlu0 %v977, 96
        %v1000 = vpop.permute.xlu0 %999
        %1001 = vrot.lane.b32.xlu0 %v978, 96
        %v1002 = vpop.permute.xlu0 %1001
        %v1011 = vsel %vm621, %v971, 0
        %v1013 = vsel %vm621, %v972, 0
        %v1015 = vsel %vm621, %v973, 0
        %v1017 = vsel %vm621, %v974, 0
        %v1019 = vsel %vm621, %v975, 0
        %v1021 = vsel %vm621, %v976, 0
        %v1023 = vsel %vm621, %v977, 0
        %v1025 = vsel %vm621, %v978, 0
        %1027 = vmatprep.subr.mxu0 0.0
        %1028 = vmatpush1.msra.mxu0 %v967
        %1029 = vmatprep.subr.mxu0 0.0
        %1030 = vmatpush1.msra.mxu0 %v968
        %1031 = vmatprep.subr.mxu0 0.0
        %1032 = vmatpush1.msra.mxu0 %v969
        %1033 = vmatprep.subr.mxu0 0.0
        %1034 = vmatpush1.msra.mxu0 %v970
        %1035 = vmatprep.subr.mxu0 0.0
        %1036 = vmatpush1.msra.mxu0 0.0
        %1037 = vmatprep.subr.mxu0 0.0
        %1038 = vmatpush1.msra.mxu0 0.0
        %1039 = vmatprep.subr.mxu0 0.0
        %1040 = vmatpush1.msra.mxu0 0.0
        %1041 = vmatprep.subr.mxu0 0.0
        %1042 = vmatpush1.msra.mxu0 0.0
        %1043 = vmatprep.subr.mxu0 0.0
        %1044 = vmatpush1.msra.mxu0 0.0
        %1045 = vmatprep.subr.mxu0 0.0
        %1046 = vmatpush1.msra.mxu0 0.0
        %1047 = vmatprep.subr.mxu0 0.0
        %1048 = vmatpush1.msra.mxu0 0.0
        %1049 = vmatprep.subr.mxu0 0.0
        %1050 = vmatpush1.msra.mxu0 0.0
        %1051 = vmatprep.subr.mxu0 0.0
        %1052 = vmatpush1.msra.mxu0 0.0
        %1053 = vmatprep.subr.mxu0 0.0
        %1054 = vmatpush1.msra.mxu0 0.0
        %1055 = vmatprep.subr.mxu0 0.0
        %1056 = vmatpush1.msra.mxu0 0.0
        %1057 = vmatprep.subr.mxu0 0.0
        %1058 = vmatpush1.msra.mxu0 0.0
        %1059 = vmatprep.subr.mxu0 0.0
        %1060 = vmatpush1.msra.mxu0 0.0
        %1061 = vmatprep.subr.mxu0 0.0
        %1062 = vmatpush1.msra.mxu0 0.0
        %1063 = vmatprep.subr.mxu0 0.0
        %1064 = vmatpush1.msra.mxu0 0.0
        %1065 = vmatprep.subr.mxu0 0.0
        %1066 = vmatpush1.msra.mxu0 0.0
        %1067 = vmatprep.subr.mxu0 0.0
        %1068 = vmatpush1.msra.mxu0 0.0
        %1069 = vmatprep.subr.mxu0 0.0
        %1070 = vmatpush1.msra.mxu0 0.0
        %1071 = vmatprep.subr.mxu0 0.0
        %1072 = vmatpush1.msra.mxu0 0.0
        %1073 = vmatprep.subr.mxu0 0.0
        %1074 = vmatpush1.msra.mxu0 0.0
        %1075 = vmatprep.subr.mxu0 0.0
        %1076 = vmatpush1.msra.mxu0 0.0
        %1077 = vmatprep.subr.mxu0 0.0
        %1078 = vmatpush1.msra.mxu0 0.0
        %1079 = vmatprep.subr.mxu0 0.0
        %1080 = vmatpush1.msra.mxu0 0.0
        %1081 = vmatprep.subr.mxu0 0.0
        %1082 = vmatpush1.msra.mxu0 0.0
        %1083 = vmatprep.subr.mxu0 0.0
        %1084 = vmatpush1.msra.mxu0 0.0
        %1085 = vmatprep.subr.mxu0 0.0
        %1086 = vmatpush1.msra.mxu0 0.0
        %1087 = vmatprep.subr.mxu0 0.0
        %1088 = vmatpush1.msra.mxu0 0.0
        %1089 = vmatprep.subr.mxu0 0.0
        %1090 = vmatpush1.msra.mxu0 0.0
        %1091 = vmatprep.mubr.f32.mxu0 0.0
        %1092 = vmatmul.mubr.f32.gmra.mrb[0].mxu0 %v1011
        %v1093 = vpop.f32.mrb[0].mxu0
        %v1094 = vadd.f32 %v988, %v1093
        %v1095 = vpop.f32.mrb[0].mxu0
        %1096 = vmatprep.mubr.f32.mxu0 0.0
        %1097 = vmatmul.mubr.f32.gmra.mrb[0].mxu0 %v1013
        %v1098 = vpop.f32.mrb[0].mxu0
        %v1099 = vadd.f32 %v990, %v1098
        %v1100 = vpop.f32.mrb[0].mxu0
        %1101 = vmatprep.mubr.f32.mxu0 0.0
        %1102 = vmatmul.mubr.f32.gmra.mrb[0].mxu0 %v1015
        %v1103 = vpop.f32.mrb[0].mxu0
        %v1104 = vadd.f32 %v992, %v1103
        %v1105 = vpop.f32.mrb[0].mxu0
        %1106 = vmatprep.mubr.f32.mxu0 0.0
        %1107 = vmatmul.mubr.f32.gmra.mrb[0].mxu0 %v1017
        %v1108 = vpop.f32.mrb[0].mxu0
        %v1109 = vadd.f32 %v994, %v1108
        %v1110 = vpop.f32.mrb[0].mxu0
        %1111 = vmatprep.mubr.f32.mxu0 0.0
        %1112 = vmatmul.mubr.f32.gmra.mrb[0].mxu0 %v1019
        %v1113 = vpop.f32.mrb[0].mxu0
        %v1114 = vadd.f32 %v996, %v1113
        %v1115 = vpop.f32.mrb[0].mxu0
        %1116 = vmatprep.mubr.f32.mxu0 0.0
        %1117 = vmatmul.mubr.f32.gmra.mrb[0].mxu0 %v1021
        %v1118 = vpop.f32.mrb[0].mxu0
        %v1119 = vadd.f32 %v998, %v1118
        %v1120 = vpop.f32.mrb[0].mxu0
        %1121 = vmatprep.mubr.f32.mxu0 0.0
        %1122 = vmatmul.mubr.f32.gmra.mrb[0].mxu0 %v1023
        %v1123 = vpop.f32.mrb[0].mxu0
        %v1124 = vadd.f32 %v1000, %v1123
        %v1125 = vpop.f32.mrb[0].mxu0
        %1126 = vmatprep.mubr.f32.mxu0 0.0
        %1127 = vmatmul.mubr.f32.gmra.mrb[0].mxu0 %v1025
        %v1128 = vpop.f32.mrb[0].mxu0
        %v1129 = vadd.f32 %v1002, %v1128
        %v1130 = vpop.f32.mrb[0].mxu0
        %1131 = vdwg.mxu0
        %v1132 = vlaneseq
        %v1133 = vshrl.u32 %v1132, 7
        %v1134 = vadd.s32 %v1133, 8
        %v1135 = vadd.s32 %v1133, 16
        %v1136 = vadd.s32 %v1133, 24
        %v1137 = vadd.s32 %v1133, 32
        %v1138 = vadd.s32 %v1133, 40
        %v1139 = vadd.s32 %v1133, 48
        %v1140 = vadd.s32 %v1133, 56
        %vm1141 = vcmp.lt.s32.totalorder %v1133, 32
        %vm1142 = vcmp.lt.s32.totalorder %v1134, 32
        %vm1143 = vcmp.lt.s32.totalorder %v1135, 32
        %vm1144 = vcmp.lt.s32.totalorder %v1136, 32
        %vm1145 = vcmp.lt.s32.totalorder %v1137, 32
        %vm1146 = vcmp.lt.s32.totalorder %v1138, 32
        %vm1147 = vcmp.lt.s32.totalorder %v1139, 32
        %vm1148 = vcmp.lt.s32.totalorder %v1140, 32
        %v1149 = vxor.u32 %v1094, 2147483648
        %v1150 = vxor.u32 %v1099, 2147483648
        %v1151 = vxor.u32 %v1104, 2147483648
        %v1152 = vxor.u32 %v1109, 2147483648
        %v1153 = vxor.u32 %v1114, 2147483648
        %v1154 = vxor.u32 %v1119, 2147483648
        %v1155 = vxor.u32 %v1124, 2147483648
        %v1156 = vxor.u32 %v1129, 2147483648
        %v1157 = vmul.f32 %v1149, 1.442695
        %v1158 = vpow.pop %v1157
        %v1159 = vmul.f32 %v1150, 1.442695
        %v1160 = vpow.pop %v1159
        %v1161 = vmul.f32 %v1151, 1.442695
        %v1162 = vpow.pop %v1161
        %v1163 = vmul.f32 %v1152, 1.442695
        %v1164 = vpow.pop %v1163
        %v1165 = vmul.f32 %v1153, 1.442695
        %v1166 = vpow.pop %v1165
        %v1167 = vmul.f32 %v1154, 1.442695
        %v1168 = vpow.pop %v1167
        %v1169 = vmul.f32 %v1155, 1.442695
        %v1170 = vpow.pop %v1169
        %v1171 = vmul.f32 %v1156, 1.442695
        %v1172 = vpow.pop %v1171
        %v1173 = vadd.f32 %v1158, 1.0
        %v1174 = vadd.f32 %v1160, 1.0
        %v1175 = vadd.f32 %v1162, 1.0
        %v1176 = vadd.f32 %v1164, 1.0
        %v1177 = vadd.f32 %v1166, 1.0
        %v1178 = vadd.f32 %v1168, 1.0
        %v1179 = vadd.f32 %v1170, 1.0
        %v1180 = vadd.f32 %v1172, 1.0
        %v1181 = vrcp.pop %v1173
        %v1182 = vmul.f32 1.0, %v1181
        %v1183 = vrcp.pop %v1174
        %v1184 = vmul.f32 1.0, %v1183
        %v1185 = vrcp.pop %v1175
        %v1186 = vmul.f32 1.0, %v1185
        %v1187 = vrcp.pop %v1176
        %v1188 = vmul.f32 1.0, %v1187
        %v1189 = vrcp.pop %v1177
        %v1190 = vmul.f32 1.0, %v1189
        %v1191 = vrcp.pop %v1178
        %v1192 = vmul.f32 1.0, %v1191
        %v1193 = vrcp.pop %v1179
        %v1194 = vmul.f32 1.0, %v1193
        %v1195 = vrcp.pop %v1180
        %v1196 = vmul.f32 1.0, %v1195
        %v1197 = vmul.f32 %v1182, 0.9
        %v1198 = vmul.f32 %v1184, 0.9
        %v1199 = vmul.f32 %v1186, 0.9
        %v1200 = vmul.f32 %v1188, 0.9
        %v1201 = vmul.f32 %v1190, 0.9
        %v1202 = vmul.f32 %v1192, 0.9
        %v1203 = vmul.f32 %v1194, 0.9
        %v1204 = vmul.f32 %v1196, 0.9
        %v1205 = vadd.f32 %v1197, 0.1
        %v1206 = vadd.f32 %v1198, 0.1
        %v1207 = vadd.f32 %v1199, 0.1
        %v1208 = vadd.f32 %v1200, 0.1
        %v1209 = vadd.f32 %v1201, 0.1
        %v1210 = vadd.f32 %v1202, 0.1
        %v1211 = vadd.f32 %v1203, 0.1
        %v1212 = vadd.f32 %v1204, 0.1
        %v1213 = vsel %vm1141, %v1094, %v1205
        %v1214 = vsel %vm1142, %v1099, %v1206
        %v1215 = vsel %vm1143, %v1104, %v1207
        %v1216 = vsel %vm1144, %v1109, %v1208
        %v1217 = vsel %vm1145, %v1114, %v1209
        %v1218 = vsel %vm1146, %v1119, %v1210
        %v1219 = vsel %vm1147, %v1124, %v1211
        %v1220 = vsel %vm1148, %v1129, %v1212
        %vm1221 = vcmask 7168
        %1222 = vst.msk [vmem:[%s485] sm:$0xff] %vm1221, %v1213
        %1223 = vst.msk [vmem:[%s485 + $0x8] sm:$0xff] %vm1221, %v1214
        %1224 = vst.msk [vmem:[%s485 + $0x10] sm:$0xff] %vm1221, %v1215
        %1225 = vst.msk [vmem:[%s485 + $0x18] sm:$0xff] %vm1221, %v1216
        %1226 = vst.msk [vmem:[%s485 + $0x20] sm:$0xff] %vm1221, %v1217
        %1227 = vst.msk [vmem:[%s485 + $0x28] sm:$0xff] %vm1221, %v1218
        %1228 = vst.msk [vmem:[%s485 + $0x30] sm:$0xff] %vm1221, %v1219
        %1229 = vst.msk [vmem:[%s485 + $0x38] sm:$0xff] %vm1221, %v1220
        %v1230 = vld [vmem:[%s480] sm:$0xff]
        %v1231 = vld [vmem:[%s480 + $0x8] sm:$0xff]
        %v1232 = vld [vmem:[%s480 + $0x10] sm:$0xff]
        %v1233 = vld [vmem:[%s480 + $0x18] sm:$0xff]
        %v1234 = vmul.f32 %v1217, %v1230
        %v1235 = vmul.f32 %v1218, %v1231
        %v1236 = vmul.f32 %v1219, %v1232
        %v1237 = vmul.f32 %v1220, %v1233
        %v1238 = vadd.f32 %v1213, %v1234
        %v1239 = vadd.f32 %v1214, %v1235
        %v1240 = vadd.f32 %v1215, %v1236
        %v1241 = vadd.f32 %v1216, %v1237
        %v1242 = vld [vmem:[%s9] sm:$0xff]
        %v1243 = vld [vmem:[%s9 + $0x8] sm:$0xff]
        %v1244 = vld [vmem:[%s9 + $0x10] sm:$0xff]
        %v1245 = vld [vmem:[%s9 + $0x18] sm:$0xff]
        %v1247 = vsel %vm621, %v1242, 0
        %v1250 = vsel %vm621, %v1243, 0
        %v1253 = vsel %vm621, %v1244, 0
        %v1256 = vsel %vm621, %v1245, 0
        %1258 = vmatprep.subr.mxu0 0.0
        %1259 = vmatpush1.msra.mxu0 %v1238
        %1260 = vmatprep.subr.mxu0 0.0
        %1261 = vmatpush1.msra.mxu0 %v1239
        %1262 = vmatprep.subr.mxu0 0.0
        %1263 = vmatpush1.msra.mxu0 %v1240
        %1264 = vmatprep.subr.mxu0 0.0
        %1265 = vmatpush1.msra.mxu0 %v1241
        %1266 = vmatprep.subr.mxu0 0.0
        %1267 = vmatpush1.msra.mxu0 0.0
        %1268 = vmatprep.subr.mxu0 0.0
        %1269 = vmatpush1.msra.mxu0 0.0
        %1270 = vmatprep.subr.mxu0 0.0
        %1271 = vmatpush1.msra.mxu0 0.0
        %1272 = vmatprep.subr.mxu0 0.0
        %1273 = vmatpush1.msra.mxu0 0.0
        %1274 = vmatprep.subr.mxu0 0.0
        %1275 = vmatpush1.msra.mxu0 0.0
        %1276 = vmatprep.subr.mxu0 0.0
        %1277 = vmatpush1.msra.mxu0 0.0
        %1278 = vmatprep.subr.mxu0 0.0
        %1279 = vmatpush1.msra.mxu0 0.0
        %1280 = vmatprep.subr.mxu0 0.0
        %1281 = vmatpush1.msra.mxu0 0.0
        %1282 = vmatprep.subr.mxu0 0.0
        %1283 = vmatpush1.msra.mxu0 0.0
        %1284 = vmatprep.subr.mxu0 0.0
        %1285 = vmatpush1.msra.mxu0 0.0
        %1286 = vmatprep.subr.mxu0 0.0
        %1287 = vmatpush1.msra.mxu0 0.0
        %1288 = vmatprep.subr.mxu0 0.0
        %1289 = vmatpush1.msra.mxu0 0.0
        %1290 = vmatprep.subr.mxu0 0.0
        %1291 = vmatpush1.msra.mxu0 0.0
        %1292 = vmatprep.subr.mxu0 0.0
        %1293 = vmatpush1.msra.mxu0 0.0
        %1294 = vmatprep.subr.mxu0 0.0
        %1295 = vmatpush1.msra.mxu0 0.0
        %1296 = vmatprep.subr.mxu0 0.0
        %1297 = vmatpush1.msra.mxu0 0.0
        %1298 = vmatprep.subr.mxu0 0.0
        %1299 = vmatpush1.msra.mxu0 0.0
        %1300 = vmatprep.subr.mxu0 0.0
        %1301 = vmatpush1.msra.mxu0 0.0
        %1302 = vmatprep.subr.mxu0 0.0
        %1303 = vmatpush1.msra.mxu0 0.0
        %1304 = vmatprep.subr.mxu0 0.0
        %1305 = vmatpush1.msra.mxu0 0.0
        %1306 = vmatprep.subr.mxu0 0.0
        %1307 = vmatpush1.msra.mxu0 0.0
        %1308 = vmatprep.subr.mxu0 0.0
        %1309 = vmatpush1.msra.mxu0 0.0
        %1310 = vmatprep.subr.mxu0 0.0
        %1311 = vmatpush1.msra.mxu0 0.0
        %1312 = vmatprep.subr.mxu0 0.0
        %1313 = vmatpush1.msra.mxu0 0.0
        %1314 = vmatprep.subr.mxu0 0.0
        %1315 = vmatpush1.msra.mxu0 0.0
        %1316 = vmatprep.subr.mxu0 0.0
        %1317 = vmatpush1.msra.mxu0 0.0
        %1318 = vmatprep.subr.mxu0 0.0
        %1319 = vmatpush1.msra.mxu0 0.0
        %1320 = vmatprep.subr.mxu0 0.0
        %1321 = vmatpush1.msra.mxu0 0.0
        %1322 = vmatprep.mubr.f32.mxu0 0.0
        %1323 = vmatmul.mubr.f32.gmra.mrb[0].mxu0 %v1247
        %v1324 = vpop.f32.mrb[0].mxu0
        %v1325 = vadd.f32 0.0, %v1324
        %v1326 = vpop.f32.mrb[0].mxu0
        %1327 = vmatprep.mubr.f32.mxu0 0.0
        %1328 = vmatmul.mubr.f32.gmra.mrb[0].mxu0 %v1250
        %v1329 = vpop.f32.mrb[0].mxu0
        %v1330 = vadd.f32 0.0, %v1329
        %v1331 = vpop.f32.mrb[0].mxu0
        %1332 = vmatprep.mubr.f32.mxu0 0.0
        %1333 = vmatmul.mubr.f32.gmra.mrb[0].mxu0 %v1253
        %v1334 = vpop.f32.mrb[0].mxu0
        %v1335 = vadd.f32 0.0, %v1334
        %v1336 = vpop.f32.mrb[0].mxu0
        %1337 = vmatprep.mubr.f32.mxu0 0.0
        %1338 = vmatmul.mubr.f32.gmra.mrb[0].mxu0 %v1256
        %v1339 = vpop.f32.mrb[0].mxu0
        %v1340 = vadd.f32 0.0, %v1339
        %v1341 = vpop.f32.mrb[0].mxu0
        %1342 = vdwg.mxu0
        %v1343 = vld [vmem:[%s475] sm:$0x7]
        %v1344 = vld [vmem:[%s8] sm:$0xff]
        %v1345 = vld [vmem:[%s8 + $0x8] sm:$0xff]
        %v1346 = vld [vmem:[%s8 + $0x10] sm:$0xff]
        %v1347 = vld [vmem:[%s8 + $0x18] sm:$0xff]
        %1349 = vset.pattern.permute.xlu0 0
        %1350 = vperm.xlu0 %1349, %v1325
        %v1351 = vpop.permute.xlu0 %1350
        %1354 = vset.pattern.permute.xlu0 0
        %1355 = vperm.xlu0 %1354, %v1330
        %v1356 = vpop.permute.xlu0 %1355
        %1359 = vset.pattern.permute.xlu0 0
        %1360 = vperm.xlu0 %1359, %v1335
        %v1361 = vpop.permute.xlu0 %1360
        %1364 = vset.pattern.permute.xlu0 0
        %1365 = vperm.xlu0 %1364, %v1340
        %v1366 = vpop.permute.xlu0 %1365
        %vm1368 = vcmask 23552
        %v1370 = vsel %vm1368, %v1344, 0
        %v1373 = vsel %vm1368, %v1345, 0
        %v1376 = vsel %vm1368, %v1346, 0
        %v1379 = vsel %vm1368, %v1347, 0
        %vm1381 = vcmask 1042432
        %v1383 = vsel %vm1381, %v1343, 0
        %1385 = vmatprep.subr.mxu0 0.0
        %1386 = vmatpush1.msra.mxu0 %v1383
        %1387 = vmatprep.subr.mxu0 0.0
        %1388 = vmatpush1.msra.mxu0 0.0
        %1389 = vmatprep.subr.mxu0 0.0
        %1390 = vmatpush1.msra.mxu0 0.0
        %1391 = vmatprep.subr.mxu0 0.0
        %1392 = vmatpush1.msra.mxu0 0.0
        %1393 = vmatprep.subr.mxu0 0.0
        %1394 = vmatpush1.msra.mxu0 0.0
        %1395 = vmatprep.subr.mxu0 0.0
        %1396 = vmatpush1.msra.mxu0 0.0
        %1397 = vmatprep.subr.mxu0 0.0
        %1398 = vmatpush1.msra.mxu0 0.0
        %1399 = vmatprep.subr.mxu0 0.0
        %1400 = vmatpush1.msra.mxu0 0.0
        %1401 = vmatprep.subr.mxu0 0.0
        %1402 = vmatpush1.msra.mxu0 0.0
        %1403 = vmatprep.subr.mxu0 0.0
        %1404 = vmatpush1.msra.mxu0 0.0
        %1405 = vmatprep.subr.mxu0 0.0
        %1406 = vmatpush1.msra.mxu0 0.0
        %1407 = vmatprep.subr.mxu0 0.0
        %1408 = vmatpush1.msra.mxu0 0.0
        %1409 = vmatprep.subr.mxu0 0.0
        %1410 = vmatpush1.msra.mxu0 0.0
        %1411 = vmatprep.subr.mxu0 0.0
        %1412 = vmatpush1.msra.mxu0 0.0
        %1413 = vmatprep.subr.mxu0 0.0
        %1414 = vmatpush1.msra.mxu0 0.0
        %1415 = vmatprep.subr.mxu0 0.0
        %1416 = vmatpush1.msra.mxu0 0.0
        %1417 = vmatprep.subr.mxu0 0.0
        %1418 = vmatpush1.msra.mxu0 0.0
        %1419 = vmatprep.subr.mxu0 0.0
        %1420 = vmatpush1.msra.mxu0 0.0
        %1421 = vmatprep.subr.mxu0 0.0
        %1422 = vmatpush1.msra.mxu0 0.0
        %1423 = vmatprep.subr.mxu0 0.0
        %1424 = vmatpush1.msra.mxu0 0.0
        %1425 = vmatprep.subr.mxu0 0.0
        %1426 = vmatpush1.msra.mxu0 0.0
        %1427 = vmatprep.subr.mxu0 0.0
        %1428 = vmatpush1.msra.mxu0 0.0
        %1429 = vmatprep.subr.mxu0 0.0
        %1430 = vmatpush1.msra.mxu0 0.0
        %1431 = vmatprep.subr.mxu0 0.0
        %1432 = vmatpush1.msra.mxu0 0.0
        %1433 = vmatprep.subr.mxu0 0.0
        %1434 = vmatpush1.msra.mxu0 0.0
        %1435 = vmatprep.subr.mxu0 0.0
        %1436 = vmatpush1.msra.mxu0 0.0
        %1437 = vmatprep.subr.mxu0 0.0
        %1438 = vmatpush1.msra.mxu0 0.0
        %1439 = vmatprep.subr.mxu0 0.0
        %1440 = vmatpush1.msra.mxu0 0.0
        %1441 = vmatprep.subr.mxu0 0.0
        %1442 = vmatpush1.msra.mxu0 0.0
        %1443 = vmatprep.subr.mxu0 0.0
        %1444 = vmatpush1.msra.mxu0 0.0
        %1445 = vmatprep.subr.mxu0 0.0
        %1446 = vmatpush1.msra.mxu0 0.0
        %1447 = vmatprep.subr.mxu0 0.0
        %1448 = vmatpush1.msra.mxu0 0.0
        %1449 = vmatprep.mubr.f32.mxu0 0.0
        %1450 = vmatmul.mubr.f32.gmra.mrb[0].mxu0 %v1370
        %v1451 = vpop.f32.mrb[0].mxu0
        %v1452 = vadd.f32 %v1351, %v1451
        %v1453 = vpop.f32.mrb[0].mxu0
        %1454 = vmatprep.mubr.f32.mxu0 0.0
        %1455 = vmatmul.mubr.f32.gmra.mrb[0].mxu0 %v1373
        %v1456 = vpop.f32.mrb[0].mxu0
        %v1457 = vadd.f32 %v1356, %v1456
        %v1458 = vpop.f32.mrb[0].mxu0
        %1459 = vmatprep.mubr.f32.mxu0 0.0
        %1460 = vmatmul.mubr.f32.gmra.mrb[0].mxu0 %v1376
        %v1461 = vpop.f32.mrb[0].mxu0
        %v1462 = vadd.f32 %v1361, %v1461
        %v1463 = vpop.f32.mrb[0].mxu0
        %1464 = vmatprep.mubr.f32.mxu0 0.0
        %1465 = vmatmul.mubr.f32.gmra.mrb[0].mxu0 %v1379
        %v1466 = vpop.f32.mrb[0].mxu0
        %v1467 = vadd.f32 %v1366, %v1466
        %v1468 = vpop.f32.mrb[0].mxu0
        %1469 = vdwg.mxu0
        %v1470 = vmax.f32 %v1452, 0.0
        %v1471 = vmax.f32 %v1457, 0.0
        %v1472 = vmax.f32 %v1462, 0.0
        %v1473 = vmax.f32 %v1467, 0.0
        %v1474 = vld [vmem:[%s10] sm:$0xff]
        %v1475 = vld [vmem:[%s10 + $0x8] sm:$0xff]
        %v1476 = vld [vmem:[%s10 + $0x10] sm:$0xff]
        %v1477 = vld [vmem:[%s10 + $0x18] sm:$0xff]
        %1479 = vset.pattern.permute.xlu0 32
        %1480 = vperm.xlu0 %1479, %v1474
        %v1481 = vpop.permute.xlu0 %1480
        %1484 = vset.pattern.permute.xlu0 32
        %1485 = vperm.xlu0 %1484, %v1475
        %v1486 = vpop.permute.xlu0 %1485
        %1489 = vset.pattern.permute.xlu0 32
        %1490 = vperm.xlu0 %1489, %v1476
        %v1491 = vpop.permute.xlu0 %1490
        %1494 = vset.pattern.permute.xlu0 32
        %1495 = vperm.xlu0 %1494, %v1477
        %v1496 = vpop.permute.xlu0 %1495
        %v1498 = vsel %vm621, %v1474, 0
        %v1500 = vsel %vm621, %v1475, 0
        %v1502 = vsel %vm621, %v1476, 0
        %v1504 = vsel %vm621, %v1477, 0
        %1506 = vmatprep.subr.mxu0 0.0
        %1507 = vmatpush1.msra.mxu0 %v1470
        %1508 = vmatprep.subr.mxu0 0.0
        %1509 = vmatpush1.msra.mxu0 %v1471
        %1510 = vmatprep.subr.mxu0 0.0
        %1511 = vmatpush1.msra.mxu0 %v1472
        %1512 = vmatprep.subr.mxu0 0.0
        %1513 = vmatpush1.msra.mxu0 %v1473
        %1514 = vmatprep.subr.mxu0 0.0
        %1515 = vmatpush1.msra.mxu0 0.0
        %1516 = vmatprep.subr.mxu0 0.0
        %1517 = vmatpush1.msra.mxu0 0.0
        %1518 = vmatprep.subr.mxu0 0.0
        %1519 = vmatpush1.msra.mxu0 0.0
        %1520 = vmatprep.subr.mxu0 0.0
        %1521 = vmatpush1.msra.mxu0 0.0
        %1522 = vmatprep.subr.mxu0 0.0
        %1523 = vmatpush1.msra.mxu0 0.0
        %1524 = vmatprep.subr.mxu0 0.0
        %1525 = vmatpush1.msra.mxu0 0.0
        %1526 = vmatprep.subr.mxu0 0.0
        %1527 = vmatpush1.msra.mxu0 0.0
        %1528 = vmatprep.subr.mxu0 0.0
        %1529 = vmatpush1.msra.mxu0 0.0
        %1530 = vmatprep.subr.mxu0 0.0
        %1531 = vmatpush1.msra.mxu0 0.0
        %1532 = vmatprep.subr.mxu0 0.0
        %1533 = vmatpush1.msra.mxu0 0.0
        %1534 = vmatprep.subr.mxu0 0.0
        %1535 = vmatpush1.msra.mxu0 0.0
        %1536 = vmatprep.subr.mxu0 0.0
        %1537 = vmatpush1.msra.mxu0 0.0
        %1538 = vmatprep.subr.mxu0 0.0
        %1539 = vmatpush1.msra.mxu0 0.0
        %1540 = vmatprep.subr.mxu0 0.0
        %1541 = vmatpush1.msra.mxu0 0.0
        %1542 = vmatprep.subr.mxu0 0.0
        %1543 = vmatpush1.msra.mxu0 0.0
        %1544 = vmatprep.subr.mxu0 0.0
        %1545 = vmatpush1.msra.mxu0 0.0
        %1546 = vmatprep.subr.mxu0 0.0
        %1547 = vmatpush1.msra.mxu0 0.0
        %1548 = vmatprep.subr.mxu0 0.0
        %1549 = vmatpush1.msra.mxu0 0.0
        %1550 = vmatprep.subr.mxu0 0.0
        %1551 = vmatpush1.msra.mxu0 0.0
        %1552 = vmatprep.subr.mxu0 0.0
        %1553 = vmatpush1.msra.mxu0 0.0
        %1554 = vmatprep.subr.mxu0 0.0
        %1555 = vmatpush1.msra.mxu0 0.0
        %1556 = vmatprep.subr.mxu0 0.0
        %1557 = vmatpush1.msra.mxu0 0.0
        %1558 = vmatprep.subr.mxu0 0.0
        %1559 = vmatpush1.msra.mxu0 0.0
        %1560 = vmatprep.subr.mxu0 0.0
        %1561 = vmatpush1.msra.mxu0 0.0
        %1562 = vmatprep.subr.mxu0 0.0
        %1563 = vmatpush1.msra.mxu0 0.0
        %1564 = vmatprep.subr.mxu0 0.0
        %1565 = vmatpush1.msra.mxu0 0.0
        %1566 = vmatprep.subr.mxu0 0.0
        %1567 = vmatpush1.msra.mxu0 0.0
        %1568 = vmatprep.subr.mxu0 0.0
        %1569 = vmatpush1.msra.mxu0 0.0
        %1570 = vmatprep.mubr.f32.mxu0 0.0
        %1571 = vmatmul.mubr.f32.gmra.mrb[0].mxu0 %v1498
        %v1572 = vpop.f32.mrb[0].mxu0
        %v1573 = vadd.f32 %v1481, %v1572
        %v1574 = vpop.f32.mrb[0].mxu0
        %1575 = vmatprep.mubr.f32.mxu0 0.0
        %1576 = vmatmul.mubr.f32.gmra.mrb[0].mxu0 %v1500
        %v1577 = vpop.f32.mrb[0].mxu0
        %v1578 = vadd.f32 %v1486, %v1577
        %v1579 = vpop.f32.mrb[0].mxu0
        %1580 = vmatprep.mubr.f32.mxu0 0.0
        %1581 = vmatmul.mubr.f32.gmra.mrb[0].mxu0 %v1502
        %v1582 = vpop.f32.mrb[0].mxu0
        %v1583 = vadd.f32 %v1491, %v1582
        %v1584 = vpop.f32.mrb[0].mxu0
        %1585 = vmatprep.mubr.f32.mxu0 0.0
        %1586 = vmatmul.mubr.f32.gmra.mrb[0].mxu0 %v1504
        %v1587 = vpop.f32.mrb[0].mxu0
        %v1588 = vadd.f32 %v1496, %v1587
        %v1589 = vpop.f32.mrb[0].mxu0
        %1590 = vdwg.mxu0
        %v1591 = vmax.f32 %v1573, 0.0
        %v1592 = vmax.f32 %v1578, 0.0
        %v1593 = vmax.f32 %v1583, 0.0
        %v1594 = vmax.f32 %v1588, 0.0
        %v1595 = vld [vmem:[%s11] sm:$0x3]
        %1597 = vset.pattern.permute.xlu0 32
        %1598 = vperm.xlu0 %1597, %v1595
        %v1599 = vpop.permute.xlu0 %1598
        %v1601 = vsel %vm621, %v1595, 0
        %1603 = vmatprep.subr.mxu0 0.0
        %1604 = vmatpush1.msra.mxu0 %v1591
        %1605 = vmatprep.subr.mxu0 0.0
        %1606 = vmatpush1.msra.mxu0 %v1592
        %1607 = vmatprep.subr.mxu0 0.0
        %1608 = vmatpush1.msra.mxu0 %v1593
        %1609 = vmatprep.subr.mxu0 0.0
        %1610 = vmatpush1.msra.mxu0 %v1594
        %1611 = vmatprep.subr.mxu0 0.0
        %1612 = vmatpush1.msra.mxu0 0.0
        %1613 = vmatprep.subr.mxu0 0.0
        %1614 = vmatpush1.msra.mxu0 0.0
        %1615 = vmatprep.subr.mxu0 0.0
        %1616 = vmatpush1.msra.mxu0 0.0
        %1617 = vmatprep.subr.mxu0 0.0
        %1618 = vmatpush1.msra.mxu0 0.0
        %1619 = vmatprep.subr.mxu0 0.0
        %1620 = vmatpush1.msra.mxu0 0.0
        %1621 = vmatprep.subr.mxu0 0.0
        %1622 = vmatpush1.msra.mxu0 0.0
        %1623 = vmatprep.subr.mxu0 0.0
        %1624 = vmatpush1.msra.mxu0 0.0
        %1625 = vmatprep.subr.mxu0 0.0
        %1626 = vmatpush1.msra.mxu0 0.0
        %1627 = vmatprep.subr.mxu0 0.0
        %1628 = vmatpush1.msra.mxu0 0.0
        %1629 = vmatprep.subr.mxu0 0.0
        %1630 = vmatpush1.msra.mxu0 0.0
        %1631 = vmatprep.subr.mxu0 0.0
        %1632 = vmatpush1.msra.mxu0 0.0
        %1633 = vmatprep.subr.mxu0 0.0
        %1634 = vmatpush1.msra.mxu0 0.0
        %1635 = vmatprep.subr.mxu0 0.0
        %1636 = vmatpush1.msra.mxu0 0.0
        %1637 = vmatprep.subr.mxu0 0.0
        %1638 = vmatpush1.msra.mxu0 0.0
        %1639 = vmatprep.subr.mxu0 0.0
        %1640 = vmatpush1.msra.mxu0 0.0
        %1641 = vmatprep.subr.mxu0 0.0
        %1642 = vmatpush1.msra.mxu0 0.0
        %1643 = vmatprep.subr.mxu0 0.0
        %1644 = vmatpush1.msra.mxu0 0.0
        %1645 = vmatprep.subr.mxu0 0.0
        %1646 = vmatpush1.msra.mxu0 0.0
        %1647 = vmatprep.subr.mxu0 0.0
        %1648 = vmatpush1.msra.mxu0 0.0
        %1649 = vmatprep.subr.mxu0 0.0
        %1650 = vmatpush1.msra.mxu0 0.0
        %1651 = vmatprep.subr.mxu0 0.0
        %1652 = vmatpush1.msra.mxu0 0.0
        %1653 = vmatprep.subr.mxu0 0.0
        %1654 = vmatpush1.msra.mxu0 0.0
        %1655 = vmatprep.subr.mxu0 0.0
        %1656 = vmatpush1.msra.mxu0 0.0
        %1657 = vmatprep.subr.mxu0 0.0
        %1658 = vmatpush1.msra.mxu0 0.0
        %1659 = vmatprep.subr.mxu0 0.0
        %1660 = vmatpush1.msra.mxu0 0.0
        %1661 = vmatprep.subr.mxu0 0.0
        %1662 = vmatpush1.msra.mxu0 0.0
        %1663 = vmatprep.subr.mxu0 0.0
        %1664 = vmatpush1.msra.mxu0 0.0
        %1665 = vmatprep.subr.mxu0 0.0
        %1666 = vmatpush1.msra.mxu0 0.0
        %1667 = vmatprep.mubr.f32.mxu0 0.0
        %1668 = vmatmul.mubr.f32.gmra.mrb[0].mxu0 %v1601
        %v1669 = vpop.f32.mrb[0].mxu0
        %v1670 = vadd.f32 %v1599, %v1669
        %v1671 = vpop.f32.mrb[0].mxu0
        %1672 = vdwg.mxu0
        %vm1673 = vcmp.lt.s32.totalorder %v1133, 1
        %v1674 = vmax.f32 %v1670, 0.0
        %vm1675 = vcmp.ne.f32.partialorder %v1670, %v1670
        %v1676 = vadd.f32 %v1670, 0.0
        %v1677 = vand.u32 2147483647, %v1670
        %v1678 = vsub.f32 0.0, %v1677
        %v1679 = vmul.f32 %v1678, 1.442695
        %v1680 = vpow.pop %v1679
        %v1681 = vadd.f32 %v1680, 1.0
        %v1682 = vlog2.pop %v1681
        %v1683 = vmul.f32 %v1682, 0.6931472
        %v1684 = vmul.f32 -0.5, %v1680
        %v1685 = vadd.f32 %v1684, 1.0
        %v1686 = vmul.f32 %v1685, %v1680
        %v1687 = vand.u32 2147483647, %v1680
        %vm1688 = vcmp.lt.f32.partialorder %v1687, 0.0004427343
        %v1689 = vsel %vm1688, %v1686, %v1683
        %v1690 = vadd.f32 %v1674, %v1689
        %v1691 = vsel %vm1675, %v1676, %v1690
        %v1692 = vmul.f32 %v1691, 0.9
        %v1693 = vadd.f32 %v1692, 0.1
        %v1694 = vsel %vm1673, %v1670, %v1693
        %vm1695 = vcmask 254976
        %1696 = vst.msk [vmem:[%s467] sm:$0x3] %vm1695, %v1694
        %p1697 = scmp.lt.s32.totalorder %s28, 3
        %s1698 = scalar_select %p1697, %s28, 3
        %s1699 = smul.addr %s1698, 8
        %s1700 = smul.addr %s1699, 8
        %s1701 = scalar_lea.vmem %s12, %s1700
        %s1702 = sand.u32 %s329, 1
        %s1703 = scalar_lea.sflag [#allocation3], %s1702
        %s1704 = sand.u32 %s329, 1
        %s1705 = smul.addr %s1704, 2
        %s1706 = scalar_lea.vmem [#allocation2], %s1705
        // Predicated region
        $region69: #{tpu_custom_call.1} parent=67 // pred_check
          %p1707 = pneg %p313
        $region70: #{tpu_custom_call.1} parent=67 // pred_check_branch
          %1709 = sbr.rel (%p1707) target = $region72
        $region71: #{tpu_custom_call.1} parent=67 // pred_region
          _
        $region72: #{tpu_custom_call.1} parent=67 // pred_fallthru
          _
        // Predicated region
        $region73: #{tpu_custom_call.1} parent=67 // pred_check
          %p1710 = pneg %p339
        $region74: #{tpu_custom_call.1} parent=67 // pred_check_branch
          %1712 = sbr.rel (%p1710) target = $region76
        $region75: #{tpu_custom_call.1} parent=67 // pred_region
          %s1714 = ssub.s32 32, 32
          %1715 = vsyncadd %s1703, %s1714
          %s1716 = smul.addr %s28, 32
          %s1717 = scalar_lea.hbm %s13, %s1716
          %s1719 = sshll.u32 %s1706, 4
          %s1720 = int_to_ptr.vmem [resolvable:$true] %s1719
          %1722 = dma.vmem_to_hbm [thread:$0]  %s1720, 32, %s1717, %s1703
        $region76: #{tpu_custom_call.1} parent=67 // pred_fallthru
          _
      $region68: #{tpu_custom_call.1} parent=5 // pred_fallthru
        _
      %p1723 = scmp.le.s32.totalorder 2, %s23
      // Predicated region
      $region77: #{tpu_custom_call.1} parent=5 // pred_check
        %p1724 = pneg %p1723
      $region78: #{tpu_custom_call.1} parent=5 // pred_check_branch
        %1726 = sbr.rel (%p1724) target = $region80
      $region79: #{tpu_custom_call.1} parent=5 // pred_region
        %s1727 = ssub.s32 %s23, 2
        // Predicated region
        $region81: #{tpu_custom_call.1} parent=79 // pred_check
          %p1728 = pneg %p319
        $region82: #{tpu_custom_call.1} parent=79 // pred_check_branch
          %1730 = sbr.rel (%p1728) target = $region84
        $region83: #{tpu_custom_call.1} parent=79 // pred_region
          %p1731 = scmp.lt.s32.totalorder %s29, 3
          %s1732 = scalar_select %p1731, %s29, 3
          %s1733 = smul.addr %s1732, 8
          %s1734 = smul.addr %s1733, 8
          %s1735 = scalar_lea.vmem %s12, %s1734
        $region84: #{tpu_custom_call.1} parent=79 // pred_fallthru
          _
        // Predicated region
        $region85: #{tpu_custom_call.1} parent=79 // pred_check
          %p1736 = pneg %p345
        $region86: #{tpu_custom_call.1} parent=79 // pred_check_branch
          %1738 = sbr.rel (%p1736) target = $region88
        $region87: #{tpu_custom_call.1} parent=79 // pred_region
          %s1739 = sand.u32 %s330, 1
          %s1740 = scalar_lea.sflag [#allocation3], %s1739
          %s1741 = sand.u32 %s330, 1
          %s1742 = smul.addr %s1741, 2
          %s1743 = scalar_lea.vmem [#allocation2], %s1742
          %1744 = dma.done %s1740, 32
        $region88: #{tpu_custom_call.1} parent=79 // pred_fallthru
          _
      $region80: #{tpu_custom_call.1} parent=5 // pred_fallthru
        _
    $region6: #{tpu_custom_call.1} parent=1 // loop_footer
      %s27 = sadd.s32 1, %s23
    $region7: #{tpu_custom_call.1} parent=1 // loop_footer_branch
      %22 = sbr.rel target = $region3
    $region8: #{tpu_custom_call.1} parent=1 // loop_exit
      _
    %1745 = vsyncpa [#allocation3], 1
    %s1746 = scalar_lea.sflag [#allocation3], 1
    %1747 = vsyncpa %s1746, 1

</llo_original>
